<compile_context>
chip_gen: v7x
topology: tpu7x:2x2x1
jax: 0.10.0
libtpu: 0.0.40
codegen_flags: <defaults>
</compile_context>

<pallas_src>
import jax
import jax.numpy as jnp
from jax.experimental import pallas as pl
from jax.experimental.pallas import tpu as pltpu

LIB_PAD = 128  # lane-dense pad region of the packed output holding `library`


def encoder_kernel(x_ref, w1_ref, b1_ref, wms_ref, bms_ref, out_ref):
    L2 = wms_ref.shape[1]          # 2 * latent_dims (fused mu|sigma width)
    L = L2 // 2

    x = x_ref[...]                                         # (tb, D_in) f32

    # library = row-sum of the raw counts (XLU reduce, overlaps MXU work).
    lib = jnp.sum(x, axis=1, keepdims=True)                # (tb, 1)

    # h = relu(log1p(x) @ W1 + b1): bf16 MXU operands, f32 accumulation.
    xl = jnp.log1p(x).astype(jnp.bfloat16)
    h = jnp.dot(xl, w1_ref[...],
                preferred_element_type=jnp.float32) + b1_ref[...]
    h = jnp.maximum(h, 0.0)

    # Fused mu|sigma projection: one lane-dense (tb, 2L) matmul + bias.
    ms = jnp.dot(h.astype(jnp.bfloat16), wms_ref[...],
                 preferred_element_type=jnp.float32) + bms_ref[...]

    # sigma = exp() only on the upper L lanes via a masked select:
    # VPU select + EUP exp (EUP slot otherwise idle), no lane slice/concat.
    col = jax.lax.broadcasted_iota(jnp.int32, ms.shape, 1)
    musig = jnp.where(col >= L, jnp.exp(ms), ms)           # [mu | sigma]

    # Single lane-dense packed store: [mu | sigma | library (broadcast)].
    out_ref[:, :L2] = musig                                # vreg-aligned store
    out_ref[:, L2:] = jnp.broadcast_to(lib, (x.shape[0], LIB_PAD))


def encoder_forward(x, w1, b1, wmu, bmu, wsig, bsig, eps, *, tb=256):
    """Pallas Encoder forward. Returns (z, mu, sigma, library)."""
    B, D_in = x.shape
    H = w1.shape[1]
    L = wmu.shape[1]
    OUT_W = 2 * L + LIB_PAD

    # Fuse the mu / sigma projections into one weight / bias; cast matmul
    # weights to bf16 (halves their DMA bytes, enables the bf16 MXU rate).
    w1_b = w1.astype(jnp.bfloat16)
    b1_f = b1.reshape(1, H).astype(jnp.float32)
    wms = jnp.concatenate([wmu, wsig], axis=1).astype(jnp.bfloat16)   # (H, 2L)
    bms = jnp.concatenate(
        [bmu.reshape(1, L), bsig.reshape(1, L)], axis=1).astype(jnp.float32)

    # Batch tile: whole batch in one step if it fits, else a multiple of 8
    # sublanes. No jnp.pad: cdiv grid + partial last block (over-read rows
    # are garbage but never reduced across rows and never returned).
    if tb >= B:
        tb = B
    else:
        tb = max(8, (tb // 8) * 8)
    grid = (pl.cdiv(B, tb),)

    packed = pl.pallas_call(
        encoder_kernel,
        out_shape=jax.ShapeDtypeStruct((B, OUT_W), jnp.float32),
        grid=grid,
        in_specs=[
            pl.BlockSpec((tb, D_in), lambda i: (i, 0)),     # x: batch-tiled
            pl.BlockSpec((D_in, H), lambda i: (0, 0)),      # w1: VMEM-resident
            pl.BlockSpec((1, H), lambda i: (0, 0)),         # b1
            pl.BlockSpec((H, 2 * L), lambda i: (0, 0)),     # fused wmu|wsig
            pl.BlockSpec((1, 2 * L), lambda i: (0, 0)),     # fused bmu|bsig
        ],
        out_specs=pl.BlockSpec((tb, OUT_W), lambda i: (i, 0)),  # packed slab
        compiler_params=pltpu.CompilerParams(
            dimension_semantics=("parallel",),   # megacore batch split on v7x
            # 32 MiB is safe across v5e/v6e/v7x at these shapes; raise toward
            # 64-96 MiB on v5e/v6e (128 MiB physical) for large input_size.
            vmem_limit_bytes=32 * 1024 * 1024,
        ),
    )(x, w1_b, b1_f, wms, bms)

    mu = packed[:, :L]
    sigma = packed[:, L:2 * L]
    library = packed[:, 2 * L:2 * L + 1]
    # Reparameterization in the wrapper (XLA fuses the elementwise op):
    # removes the narrow eps/z DMA streams from the kernel.
    z = mu + sigma * eps
    return z, mu, sigma, library


def encoder_forward_ref(x, w1, b1, wmu, bmu, wsig, bsig, eps):
    """Pure-JAX (f32) reference for correctness checking."""
    library = jnp.sum(x, axis=1, keepdims=True)
    h = jax.nn.relu(jnp.log1p(x) @ w1 + b1)
    mu = h @ wmu + bmu
    sigma = jnp.exp(h @ wsig + bsig)
    z = mu + sigma * eps
    return z, mu, sigma, library


if __name__ == "__main__":
    # Small, kernel-friendly shapes consistent with the module's __init__.
    B = 256          # batch -> single grid step at tb=256
    D_IN = 256       # input_size
    HID = 128        # hidden_dims
    LAT = 64         # latent_dims

    key = jax.random.PRNGKey(0)
    kx, k1, k2, k3, k4, k5, k6, keps = jax.random.split(key, 8)

    # Non-negative counts-like input (nbVAE operates on count data).
    x = jax.random.uniform(kx, (B, D_IN), dtype=jnp.float32) * 10.0

    # Weights stored as (in_features, out_features); biases as (1, out).
    def init_linear(kw, kb, fan_in, fan_out):
        bound = 1.0 / jnp.sqrt(jnp.float32(fan_in))
        w = jax.random.uniform(kw, (fan_in, fan_out), jnp.float32, -bound, bound)
        b = jax.random.uniform(kb, (1, fan_out), jnp.float32, -bound, bound)
        return w, b

    w1, b1 = init_linear(k1, k2, D_IN, HID)
    wmu, bmu = init_linear(k3, k4, HID, LAT)
    wsig, bsig = init_linear(k5, k6, HID, LAT)

    # Standard-normal sample for the reparameterization trick.
    eps = jax.random.normal(keps, (B, LAT), dtype=jnp.float32)

    z, mu, sigma, library = encoder_forward(
        x, w1, b1, wmu, bmu, wsig, bsig, eps, tb=256)
    jax.block_until_ready((z, mu, sigma, library))

    # Sanity check against pure-f32 reference (loosened tolerance: the kernel
    # uses bf16 MXU operands with f32 accumulation).
    z_r, mu_r, sg_r, lib_r = encoder_forward_ref(
        x, w1, b1, wmu, bmu, wsig, bsig, eps)
    assert jnp.allclose(library, lib_r, atol=1e-3, rtol=1e-5), "library mismatch"
    assert jnp.allclose(mu, mu_r, atol=5e-2, rtol=5e-2), "mu mismatch"
    assert jnp.allclose(sigma, sg_r, atol=1e-1, rtol=5e-2), "sigma mismatch"
    assert jnp.allclose(z, z_r, atol=2e-1, rtol=5e-2), "z mismatch"

    print("KERNEL_OK")
</pallas_src>

<mosaic_0001>
module attributes {stable_mosaic.version = 11 : i64} {
  func.func @encoder_kernel(%arg0: i32, %arg1: memref<256x256xf32, #tpu.memory_space<vmem>>, %arg2: memref<256x128xbf16, #tpu.memory_space<vmem>>, %arg3: memref<1x128xf32, #tpu.memory_space<vmem>>, %arg4: memref<128x128xbf16, #tpu.memory_space<vmem>>, %arg5: memref<1x128xf32, #tpu.memory_space<vmem>>, %arg6: memref<256x256xf32, #tpu.memory_space<vmem>>) attributes {dimension_semantics = [#tpu.dimension_semantics<parallel>], iteration_bounds = array<i64: 1>, scalar_prefetch = 0 : i64, scratch_operands = 0 : i64, tpu.core_type = #tpu.core_type<tc>, window_params = [{transform_indices = @transform_0, window_bounds = array<i64: 256, 256>}, {pipeline_mode = #tpu.pipeline_mode<synchronous>, transform_indices = @transform_1, window_bounds = array<i64: 256, 128>}, {pipeline_mode = #tpu.pipeline_mode<synchronous>, transform_indices = @transform_2, window_bounds = array<i64: 1, 128>}, {pipeline_mode = #tpu.pipeline_mode<synchronous>, transform_indices = @transform_3, window_bounds = array<i64: 128, 128>}, {pipeline_mode = #tpu.pipeline_mode<synchronous>, transform_indices = @transform_4, window_bounds = array<i64: 1, 128>}, {transform_indices = @transform_5, window_bounds = array<i64: 256, 256>}]} {
    %c0 = arith.constant 0 : index
    %c0_0 = arith.constant 0 : index
    %0 = vector.load %arg1[%c0, %c0_0] : memref<256x256xf32, #tpu.memory_space<vmem>>, vector<256x256xf32>
    %cst = arith.constant dense<0.000000e+00> : vector<256xf32>
    %1 = vector.multi_reduction <add>, %0, %cst [1] : vector<256x256xf32> to vector<256xf32>
    %2 = vector.shape_cast %1 : vector<256xf32> to vector<256x1xf32>
    %3 = math.log1p %0 : vector<256x256xf32>
    %4 = arith.truncf %3 : vector<256x256xf32> to vector<256x256xbf16>
    %c0_1 = arith.constant 0 : index
    %c0_2 = arith.constant 0 : index
    %5 = vector.load %arg2[%c0_1, %c0_2] : memref<256x128xbf16, #tpu.memory_space<vmem>>, vector<256x128xbf16>
    %cst_3 = arith.constant dense<0.000000e+00> : vector<256x128xf32>
    %6 = tpu.matmul %4, %5, %cst_3 {dimension_numbers = #tpu.dot_dimension_numbers<[1], [0], [0], [1], [0, 0, 1, 1], [], []>} : vector<256x256xbf16>, vector<256x128xbf16>, vector<256x128xf32> -> vector<256x128xf32>
    %c0_4 = arith.constant 0 : index
    %c0_5 = arith.constant 0 : index
    %7 = vector.load %arg3[%c0_4, %c0_5] : memref<1x128xf32, #tpu.memory_space<vmem>>, vector<1x128xf32>
    %8 = vector.broadcast %7 : vector<1x128xf32> to vector<256x128xf32>
    %9 = arith.addf %6, %8 : vector<256x128xf32>
    %cst_6 = arith.constant 0.000000e+00 : f32
    %10 = vector.broadcast %cst_6 : f32 to vector<256x128xf32>
    %11 = arith.maximumf %9, %10 : vector<256x128xf32>
    %12 = arith.truncf %11 : vector<256x128xf32> to vector<256x128xbf16>
    %c0_7 = arith.constant 0 : index
    %c0_8 = arith.constant 0 : index
    %13 = vector.load %arg4[%c0_7, %c0_8] : memref<128x128xbf16, #tpu.memory_space<vmem>>, vector<128x128xbf16>
    %cst_9 = arith.constant dense<0.000000e+00> : vector<256x128xf32>
    %14 = tpu.matmul %12, %13, %cst_9 {dimension_numbers = #tpu.dot_dimension_numbers<[1], [0], [0], [1], [0, 0, 1, 1], [], []>} : vector<256x128xbf16>, vector<128x128xbf16>, vector<256x128xf32> -> vector<256x128xf32>
    %c0_10 = arith.constant 0 : index
    %c0_11 = arith.constant 0 : index
    %15 = vector.load %arg5[%c0_10, %c0_11] : memref<1x128xf32, #tpu.memory_space<vmem>>, vector<1x128xf32>
    %16 = vector.broadcast %15 : vector<1x128xf32> to vector<256x128xf32>
    %17 = arith.addf %14, %16 : vector<256x128xf32>
    %18 = tpu.iota {dimensions = array<i32: 1>} : vector<256x128xi32>
    %c64_i32 = arith.constant 64 : i32
    %19 = vector.broadcast %c64_i32 : i32 to vector<256x128xi32>
    %20 = arith.cmpi sge, %18, %19 : vector<256x128xi32>
    %21 = math.exp %17 : vector<256x128xf32>
    %22 = arith.select %20, %21, %17 : vector<256x128xi1>, vector<256x128xf32>
    %c0_12 = arith.constant 0 : index
    %c0_13 = arith.constant 0 : index
    %23 = vector.load %arg6[%c0_12, %c0_13] : memref<256x256xf32, #tpu.memory_space<vmem>>, vector<256x128xf32>
    tpu.vector_store %arg6[%c0_12, %c0_13], %22 {strides = array<i32>} : memref<256x256xf32, #tpu.memory_space<vmem>>, vector<256x128xf32>,
    %24 = vector.shape_cast %2 : vector<256x1xf32> to vector<256x1xf32>
    %25 = vector.broadcast %24 : vector<256x1xf32> to vector<256x128xf32>
    %c0_14 = arith.constant 0 : index
    %c128 = arith.constant 128 : index
    %26 = vector.load %arg6[%c0_14, %c128] : memref<256x256xf32, #tpu.memory_space<vmem>>, vector<256x128xf32>
    tpu.vector_store %arg6[%c0_14, %c128], %25 {strides = array<i32>} : memref<256x256xf32, #tpu.memory_space<vmem>>, vector<256x128xf32>,
    return
  }
  func.func @transform_0(%arg0: i32) -> (i32, i32) {
    %c0_i32 = arith.constant 0 : i32
    %c0_i32_0 = arith.constant 0 : i32
    return %arg0, %c0_i32 : i32, i32
  }
  func.func @transform_1(%arg0: i32) -> (i32, i32) {
    %c0_i32 = arith.constant 0 : i32
    %c0_i32_0 = arith.constant 0 : i32
    %c0_i32_1 = arith.constant 0 : i32
    return %c0_i32, %c0_i32_0 : i32, i32
  }
  func.func @transform_2(%arg0: i32) -> (i32, i32) {
    %c0_i32 = arith.constant 0 : i32
    %c0_i32_0 = arith.constant 0 : i32
    %c0_i32_1 = arith.constant 0 : i32
    return %c0_i32, %c0_i32_0 : i32, i32
  }
  func.func @transform_3(%arg0: i32) -> (i32, i32) {
    %c0_i32 = arith.constant 0 : i32
    %c0_i32_0 = arith.constant 0 : i32
    %c0_i32_1 = arith.constant 0 : i32
    return %c0_i32, %c0_i32_0 : i32, i32
  }
  func.func @transform_4(%arg0: i32) -> (i32, i32) {
    %c0_i32 = arith.constant 0 : i32
    %c0_i32_0 = arith.constant 0 : i32
    %c0_i32_1 = arith.constant 0 : i32
    return %c0_i32, %c0_i32_0 : i32, i32
  }
  func.func @transform_5(%arg0: i32) -> (i32, i32) {
    %c0_i32 = arith.constant 0 : i32
    %c0_i32_0 = arith.constant 0 : i32
    return %arg0, %c0_i32 : i32, i32
  }
}

</mosaic_0001>

<llo_original>
// kernel: tpu_custom_call.1
$region0: #{tpu_custom_call.1}
  #allocation0 [shape = 'u32[]', space=smem, size = 0x4, offset = 0x4, fixed_abs, tag = 'smem constant byte address 0x4 - core index']
  #allocation1 [shape = 'u32[144,128]{1,0:T(1,128)}', space=vmem, size = 0x12000, scoped, tag = 'internal scratch']
  %s0 = inlined_call_operand.hbm [shape: f32[256,256], index: 0, kind: input, shape index: {}]
  %s1 = inlined_call_operand.hbm [shape: bf16[256,128], index: 1, kind: input, shape index: {}]
  %s2 = inlined_call_operand.vmem [shape: f32[1,128], index: 2, kind: input, shape index: {}]
  %s3 = inlined_call_operand.hbm [shape: bf16[128,128], index: 3, kind: input, shape index: {}]
  %s4 = inlined_call_operand.vmem [shape: f32[1,128], index: 4, kind: input, shape index: {}]
  %s5 = inlined_call_operand.hbm [shape: f32[256,256], index: 5, kind: output, shape index: {}]
  %s6 = sld [smem:[#allocation0]]
  $region42: #{tpu_custom_call.1} parent=0
    _
  %s8 = ssub.s32 1, %s6
  %s9 = scalar_select 0, %s8, %s6
  $region1: #{tpu_custom_call.1} parent=0
    #allocation2 [shape = 'u8[262144]{0}', space=vmem, size = 0x40000, scoped, tag = 'input window, operand 0, single buffered']
    #allocation3 [shape = 's32[1]{0}', space=sflag, size = 0x4, scoped, tag = 'scoped memory for tpu_custom_call.1']
    #allocation4 [shape = 's32[1]{0}', space=sflag, size = 0x4, scoped, tag = 'scoped memory for tpu_custom_call.1']
    #allocation5 [shape = 'u8[65536]{0}', space=vmem, size = 0x10000, scoped, tag = 'input window, operand 1, single buffered']
    #allocation6 [shape = 's32[1]{0}', space=sflag, size = 0x4, scoped, tag = 'scoped memory for tpu_custom_call.1']
    #allocation7 [shape = 'u8[32768]{0}', space=vmem, size = 0x8000, scoped, tag = 'input window, operand 3, single buffered']
    #allocation8 [shape = 'u8[262144]{0}', space=vmem, size = 0x40000, scoped, tag = 'output window, operand 0, single buffered']
    %10 = vsyncpa [#allocation3], 0
    %11 = vsyncpa [#allocation6], 0
    %12 = vsyncpa [#allocation4], 0
    // Predicated region
    $region2: #{tpu_custom_call.1} parent=1 // pred_check
      _
    $region3: #{tpu_custom_call.1} parent=1 // pred_check_branch
      %14 = sbr.rel (0) target = $region5
    $region4: #{tpu_custom_call.1} parent=1 // pred_region
      %s16 = ssub.s32 8192, 8192
      %17 = vsyncadd [#allocation3], %s16
      %s18 = sshll.u32 [#allocation2], 4
      %s19 = int_to_ptr.vmem [resolvable:$true] %s18
      %24 = dma.hbm_to_vmem [thread:$0]  %s0, 8192, %s19, [#allocation3], 256, 256, 16
    $region5: #{tpu_custom_call.1} parent=1 // pred_fallthru
      _
    // Predicated region
    $region6: #{tpu_custom_call.1} parent=1 // pred_check
      _
    $region7: #{tpu_custom_call.1} parent=1 // pred_check_branch
      %26 = sbr.rel (0) target = $region9
    $region8: #{tpu_custom_call.1} parent=1 // pred_region
      %s28 = ssub.s32 2048, 2048
      %29 = vsyncadd [#allocation6], %s28
      %s30 = sshll.u32 [#allocation5], 4
      %s31 = int_to_ptr.vmem [resolvable:$true] %s30
      %36 = dma.hbm_to_vmem [thread:$0]  %s1, 2048, %s31, [#allocation6], 64, 64, 4
    $region9: #{tpu_custom_call.1} parent=1 // pred_fallthru
      _
    // Predicated region
    $region10: #{tpu_custom_call.1} parent=1 // pred_check
      _
    $region11: #{tpu_custom_call.1} parent=1 // pred_check_branch
      %38 = sbr.rel (0) target = $region13
    $region12: #{tpu_custom_call.1} parent=1 // pred_region
      _
    $region13: #{tpu_custom_call.1} parent=1 // pred_fallthru
      _
    // Predicated region
    $region14: #{tpu_custom_call.1} parent=1 // pred_check
      _
    $region15: #{tpu_custom_call.1} parent=1 // pred_check_branch
      %40 = sbr.rel (0) target = $region17
    $region16: #{tpu_custom_call.1} parent=1 // pred_region
      %s42 = ssub.s32 1024, 1024
      %43 = vsyncadd [#allocation6], %s42
      %s44 = sshll.u32 [#allocation7], 4
      %s45 = int_to_ptr.vmem [resolvable:$true] %s44
      %50 = dma.hbm_to_vmem [thread:$0]  %s3, 1024, %s45, [#allocation6], 64, 64, 4
    $region17: #{tpu_custom_call.1} parent=1 // pred_fallthru
      _
    // Predicated region
    $region18: #{tpu_custom_call.1} parent=1 // pred_check
      _
    $region19: #{tpu_custom_call.1} parent=1 // pred_check_branch
      %52 = sbr.rel (0) target = $region21
    $region20: #{tpu_custom_call.1} parent=1 // pred_region
      _
    $region21: #{tpu_custom_call.1} parent=1 // pred_fallthru
      _
    // Predicated region
    $region22: #{tpu_custom_call.1} parent=1 // pred_check
      _
    $region23: #{tpu_custom_call.1} parent=1 // pred_check_branch
      %54 = sbr.rel (0) target = $region25
    $region24: #{tpu_custom_call.1} parent=1 // pred_region
      %55 = dma.done [#allocation3], 8192
    $region25: #{tpu_custom_call.1} parent=1 // pred_fallthru
      _
    // Predicated region
    $region26: #{tpu_custom_call.1} parent=1 // pred_check
      _
    $region27: #{tpu_custom_call.1} parent=1 // pred_check_branch
      %57 = sbr.rel (0) target = $region29
    $region28: #{tpu_custom_call.1} parent=1 // pred_region
      %58 = dma.done [#allocation6], 2048
    $region29: #{tpu_custom_call.1} parent=1 // pred_fallthru
      _
    // Predicated region
    $region30: #{tpu_custom_call.1} parent=1 // pred_check
      _
    $region31: #{tpu_custom_call.1} parent=1 // pred_check_branch
      %60 = sbr.rel (0) target = $region33
    $region32: #{tpu_custom_call.1} parent=1 // pred_region
      %61 = dma.done [#allocation6], 1024
    $region33: #{tpu_custom_call.1} parent=1 // pred_fallthru
      _
    %v63 = vld [vmem:[#allocation2] sm:$0xff]
    %v64 = vld [vmem:[#allocation2 + $0x8] sm:$0xff]
    %v65 = vld [vmem:[#allocation2 + $0x10] sm:$0xff]
    %v66 = vld [vmem:[#allocation2 + $0x18] sm:$0xff]
    %v67 = vld [vmem:[#allocation2 + $0x20] sm:$0xff]
    %v68 = vld [vmem:[#allocation2 + $0x28] sm:$0xff]
    %v69 = vld [vmem:[#allocation2 + $0x30] sm:$0xff]
    %v70 = vld [vmem:[#allocation2 + $0x38] sm:$0xff]
    %v71 = vld [vmem:[#allocation2 + $0x40] sm:$0xff]
    %v72 = vld [vmem:[#allocation2 + $0x48] sm:$0xff]
    %v73 = vld [vmem:[#allocation2 + $0x50] sm:$0xff]
    %v74 = vld [vmem:[#allocation2 + $0x58] sm:$0xff]
    %v75 = vld [vmem:[#allocation2 + $0x60] sm:$0xff]
    %v76 = vld [vmem:[#allocation2 + $0x68] sm:$0xff]
    %v77 = vld [vmem:[#allocation2 + $0x70] sm:$0xff]
    %v78 = vld [vmem:[#allocation2 + $0x78] sm:$0xff]
    %v79 = vld [vmem:[#allocation2 + $0x80] sm:$0xff]
    %v80 = vld [vmem:[#allocation2 + $0x88] sm:$0xff]
    %v81 = vld [vmem:[#allocation2 + $0x90] sm:$0xff]
    %v82 = vld [vmem:[#allocation2 + $0x98] sm:$0xff]
    %v83 = vld [vmem:[#allocation2 + $0xa0] sm:$0xff]
    %v84 = vld [vmem:[#allocation2 + $0xa8] sm:$0xff]
    %v85 = vld [vmem:[#allocation2 + $0xb0] sm:$0xff]
    %v86 = vld [vmem:[#allocation2 + $0xb8] sm:$0xff]
    %v87 = vld [vmem:[#allocation2 + $0xc0] sm:$0xff]
    %v88 = vld [vmem:[#allocation2 + $0xc8] sm:$0xff]
    %v89 = vld [vmem:[#allocation2 + $0xd0] sm:$0xff]
    %v90 = vld [vmem:[#allocation2 + $0xd8] sm:$0xff]
    %v91 = vld [vmem:[#allocation2 + $0xe0] sm:$0xff]
    %v92 = vld [vmem:[#allocation2 + $0xe8] sm:$0xff]
    %v93 = vld [vmem:[#allocation2 + $0xf0] sm:$0xff]
    %v94 = vld [vmem:[#allocation2 + $0xf8] sm:$0xff]
    %v95 = vld [vmem:[#allocation2 + $0x100] sm:$0xff]
    %v96 = vld [vmem:[#allocation2 + $0x108] sm:$0xff]
    %v97 = vld [vmem:[#allocation2 + $0x110] sm:$0xff]
    %v98 = vld [vmem:[#allocation2 + $0x118] sm:$0xff]
    %v99 = vld [vmem:[#allocation2 + $0x120] sm:$0xff]
    %v100 = vld [vmem:[#allocation2 + $0x128] sm:$0xff]
    %v101 = vld [vmem:[#allocation2 + $0x130] sm:$0xff]
    %v102 = vld [vmem:[#allocation2 + $0x138] sm:$0xff]
    %v103 = vld [vmem:[#allocation2 + $0x140] sm:$0xff]
    %v104 = vld [vmem:[#allocation2 + $0x148] sm:$0xff]
    %v105 = vld [vmem:[#allocation2 + $0x150] sm:$0xff]
    %v106 = vld [vmem:[#allocation2 + $0x158] sm:$0xff]
    %v107 = vld [vmem:[#allocation2 + $0x160] sm:$0xff]
    %v108 = vld [vmem:[#allocation2 + $0x168] sm:$0xff]
    %v109 = vld [vmem:[#allocation2 + $0x170] sm:$0xff]
    %v110 = vld [vmem:[#allocation2 + $0x178] sm:$0xff]
    %v111 = vld [vmem:[#allocation2 + $0x180] sm:$0xff]
    %v112 = vld [vmem:[#allocation2 + $0x188] sm:$0xff]
    %v113 = vld [vmem:[#allocation2 + $0x190] sm:$0xff]
    %v114 = vld [vmem:[#allocation2 + $0x198] sm:$0xff]
    %v115 = vld [vmem:[#allocation2 + $0x1a0] sm:$0xff]
    %v116 = vld [vmem:[#allocation2 + $0x1a8] sm:$0xff]
    %v117 = vld [vmem:[#allocation2 + $0x1b0] sm:$0xff]
    %v118 = vld [vmem:[#allocation2 + $0x1b8] sm:$0xff]
    %v119 = vld [vmem:[#allocation2 + $0x1c0] sm:$0xff]
    %v120 = vld [vmem:[#allocation2 + $0x1c8] sm:$0xff]
    %v121 = vld [vmem:[#allocation2 + $0x1d0] sm:$0xff]
    %v122 = vld [vmem:[#allocation2 + $0x1d8] sm:$0xff]
    %v123 = vld [vmem:[#allocation2 + $0x1e0] sm:$0xff]
    %v124 = vld [vmem:[#allocation2 + $0x1e8] sm:$0xff]
    %v125 = vld [vmem:[#allocation2 + $0x1f0] sm:$0xff]
    %v126 = vld [vmem:[#allocation2 + $0x1f8] sm:$0xff]
    %v127 = vadd.f32 %v63, %v64
    %128 = vadd.xlane.f32.xlu0 %v127
    %v129 = vpop.xlane.xlu0 %128
    %v130 = vadd.f32 %v65, %v66
    %131 = vadd.xlane.f32.xlu0 %v130
    %v132 = vpop.xlane.xlu0 %131
    %v133 = vadd.f32 %v67, %v68
    %134 = vadd.xlane.f32.xlu0 %v133
    %v135 = vpop.xlane.xlu0 %134
    %v136 = vadd.f32 %v69, %v70
    %137 = vadd.xlane.f32.xlu0 %v136
    %v138 = vpop.xlane.xlu0 %137
    %v139 = vadd.f32 %v71, %v72
    %140 = vadd.xlane.f32.xlu0 %v139
    %v141 = vpop.xlane.xlu0 %140
    %v142 = vadd.f32 %v73, %v74
    %143 = vadd.xlane.f32.xlu0 %v142
    %v144 = vpop.xlane.xlu0 %143
    %v145 = vadd.f32 %v75, %v76
    %146 = vadd.xlane.f32.xlu0 %v145
    %v147 = vpop.xlane.xlu0 %146
    %v148 = vadd.f32 %v77, %v78
    %149 = vadd.xlane.f32.xlu0 %v148
    %v150 = vpop.xlane.xlu0 %149
    %v151 = vadd.f32 %v79, %v80
    %152 = vadd.xlane.f32.xlu0 %v151
    %v153 = vpop.xlane.xlu0 %152
    %v154 = vadd.f32 %v81, %v82
    %155 = vadd.xlane.f32.xlu0 %v154
    %v156 = vpop.xlane.xlu0 %155
    %v157 = vadd.f32 %v83, %v84
    %158 = vadd.xlane.f32.xlu0 %v157
    %v159 = vpop.xlane.xlu0 %158
    %v160 = vadd.f32 %v85, %v86
    %161 = vadd.xlane.f32.xlu0 %v160
    %v162 = vpop.xlane.xlu0 %161
    %v163 = vadd.f32 %v87, %v88
    %164 = vadd.xlane.f32.xlu0 %v163
    %v165 = vpop.xlane.xlu0 %164
    %v166 = vadd.f32 %v89, %v90
    %167 = vadd.xlane.f32.xlu0 %v166
    %v168 = vpop.xlane.xlu0 %167
    %v169 = vadd.f32 %v91, %v92
    %170 = vadd.xlane.f32.xlu0 %v169
    %v171 = vpop.xlane.xlu0 %170
    %v172 = vadd.f32 %v93, %v94
    %173 = vadd.xlane.f32.xlu0 %v172
    %v174 = vpop.xlane.xlu0 %173
    %v175 = vadd.f32 %v95, %v96
    %176 = vadd.xlane.f32.xlu0 %v175
    %v177 = vpop.xlane.xlu0 %176
    %v178 = vadd.f32 %v97, %v98
    %179 = vadd.xlane.f32.xlu0 %v178
    %v180 = vpop.xlane.xlu0 %179
    %v181 = vadd.f32 %v99, %v100
    %182 = vadd.xlane.f32.xlu0 %v181
    %v183 = vpop.xlane.xlu0 %182
    %v184 = vadd.f32 %v101, %v102
    %185 = vadd.xlane.f32.xlu0 %v184
    %v186 = vpop.xlane.xlu0 %185
    %v187 = vadd.f32 %v103, %v104
    %188 = vadd.xlane.f32.xlu0 %v187
    %v189 = vpop.xlane.xlu0 %188
    %v190 = vadd.f32 %v105, %v106
    %191 = vadd.xlane.f32.xlu0 %v190
    %v192 = vpop.xlane.xlu0 %191
    %v193 = vadd.f32 %v107, %v108
    %194 = vadd.xlane.f32.xlu0 %v193
    %v195 = vpop.xlane.xlu0 %194
    %v196 = vadd.f32 %v109, %v110
    %197 = vadd.xlane.f32.xlu0 %v196
    %v198 = vpop.xlane.xlu0 %197
    %v199 = vadd.f32 %v111, %v112
    %200 = vadd.xlane.f32.xlu0 %v199
    %v201 = vpop.xlane.xlu0 %200
    %v202 = vadd.f32 %v113, %v114
    %203 = vadd.xlane.f32.xlu0 %v202
    %v204 = vpop.xlane.xlu0 %203
    %v205 = vadd.f32 %v115, %v116
    %206 = vadd.xlane.f32.xlu0 %v205
    %v207 = vpop.xlane.xlu0 %206
    %v208 = vadd.f32 %v117, %v118
    %209 = vadd.xlane.f32.xlu0 %v208
    %v210 = vpop.xlane.xlu0 %209
    %v211 = vadd.f32 %v119, %v120
    %212 = vadd.xlane.f32.xlu0 %v211
    %v213 = vpop.xlane.xlu0 %212
    %v214 = vadd.f32 %v121, %v122
    %215 = vadd.xlane.f32.xlu0 %v214
    %v216 = vpop.xlane.xlu0 %215
    %v217 = vadd.f32 %v123, %v124
    %218 = vadd.xlane.f32.xlu0 %v217
    %v219 = vpop.xlane.xlu0 %218
    %v220 = vadd.f32 %v125, %v126
    %221 = vadd.xlane.f32.xlu0 %v220
    %v222 = vpop.xlane.xlu0 %221
    %v223 = vadd.f32 %v63, 1.0
    %v224 = vlog2.pop %v223
    %v225 = vmul.f32 %v224, 0.6931472
    %v226 = vmul.f32 -0.5, %v63
    %v227 = vadd.f32 %v226, 1.0
    %v228 = vmul.f32 %v227, %v63
    %v229 = vand.u32 2147483647, %v63
    %vm230 = vcmp.lt.f32.partialorder %v229, 0.0004427343
    %v231 = vsel %vm230, %v228, %v225
    %v232 = vadd.f32 %v64, 1.0
    %v233 = vlog2.pop %v232
    %v234 = vmul.f32 %v233, 0.6931472
    %v235 = vmul.f32 -0.5, %v64
    %v236 = vadd.f32 %v235, 1.0
    %v237 = vmul.f32 %v236, %v64
    %v238 = vand.u32 2147483647, %v64
    %vm239 = vcmp.lt.f32.partialorder %v238, 0.0004427343
    %v240 = vsel %vm239, %v237, %v234
    %v241 = vadd.f32 %v65, 1.0
    %v242 = vlog2.pop %v241
    %v243 = vmul.f32 %v242, 0.6931472
    %v244 = vmul.f32 -0.5, %v65
    %v245 = vadd.f32 %v244, 1.0
    %v246 = vmul.f32 %v245, %v65
    %v247 = vand.u32 2147483647, %v65
    %vm248 = vcmp.lt.f32.partialorder %v247, 0.0004427343
    %v249 = vsel %vm248, %v246, %v243
    %v250 = vadd.f32 %v66, 1.0
    %v251 = vlog2.pop %v250
    %v252 = vmul.f32 %v251, 0.6931472
    %v253 = vmul.f32 -0.5, %v66
    %v254 = vadd.f32 %v253, 1.0
    %v255 = vmul.f32 %v254, %v66
    %v256 = vand.u32 2147483647, %v66
    %vm257 = vcmp.lt.f32.partialorder %v256, 0.0004427343
    %v258 = vsel %vm257, %v255, %v252
    %v259 = vadd.f32 %v67, 1.0
    %v260 = vlog2.pop %v259
    %v261 = vmul.f32 %v260, 0.6931472
    %v262 = vmul.f32 -0.5, %v67
    %v263 = vadd.f32 %v262, 1.0
    %v264 = vmul.f32 %v263, %v67
    %v265 = vand.u32 2147483647, %v67
    %vm266 = vcmp.lt.f32.partialorder %v265, 0.0004427343
    %v267 = vsel %vm266, %v264, %v261
    %v268 = vadd.f32 %v68, 1.0
    %v269 = vlog2.pop %v268
    %v270 = vmul.f32 %v269, 0.6931472
    %v271 = vmul.f32 -0.5, %v68
    %v272 = vadd.f32 %v271, 1.0
    %v273 = vmul.f32 %v272, %v68
    %v274 = vand.u32 2147483647, %v68
    %vm275 = vcmp.lt.f32.partialorder %v274, 0.0004427343
    %v276 = vsel %vm275, %v273, %v270
    %v277 = vadd.f32 %v69, 1.0
    %v278 = vlog2.pop %v277
    %v279 = vmul.f32 %v278, 0.6931472
    %v280 = vmul.f32 -0.5, %v69
    %v281 = vadd.f32 %v280, 1.0
    %v282 = vmul.f32 %v281, %v69
    %v283 = vand.u32 2147483647, %v69
    %vm284 = vcmp.lt.f32.partialorder %v283, 0.0004427343
    %v285 = vsel %vm284, %v282, %v279
    %v286 = vadd.f32 %v70, 1.0
    %v287 = vlog2.pop %v286
    %v288 = vmul.f32 %v287, 0.6931472
    %v289 = vmul.f32 -0.5, %v70
    %v290 = vadd.f32 %v289, 1.0
    %v291 = vmul.f32 %v290, %v70
    %v292 = vand.u32 2147483647, %v70
    %vm293 = vcmp.lt.f32.partialorder %v292, 0.0004427343
    %v294 = vsel %vm293, %v291, %v288
    %v295 = vadd.f32 %v71, 1.0
    %v296 = vlog2.pop %v295
    %v297 = vmul.f32 %v296, 0.6931472
    %v298 = vmul.f32 -0.5, %v71
    %v299 = vadd.f32 %v298, 1.0
    %v300 = vmul.f32 %v299, %v71
    %v301 = vand.u32 2147483647, %v71
    %vm302 = vcmp.lt.f32.partialorder %v301, 0.0004427343
    %v303 = vsel %vm302, %v300, %v297
    %v304 = vadd.f32 %v72, 1.0
    %v305 = vlog2.pop %v304
    %v306 = vmul.f32 %v305, 0.6931472
    %v307 = vmul.f32 -0.5, %v72
    %v308 = vadd.f32 %v307, 1.0
    %v309 = vmul.f32 %v308, %v72
    %v310 = vand.u32 2147483647, %v72
    %vm311 = vcmp.lt.f32.partialorder %v310, 0.0004427343
    %v312 = vsel %vm311, %v309, %v306
    %v313 = vadd.f32 %v73, 1.0
    %v314 = vlog2.pop %v313
    %v315 = vmul.f32 %v314, 0.6931472
    %v316 = vmul.f32 -0.5, %v73
    %v317 = vadd.f32 %v316, 1.0
    %v318 = vmul.f32 %v317, %v73
    %v319 = vand.u32 2147483647, %v73
    %vm320 = vcmp.lt.f32.partialorder %v319, 0.0004427343
    %v321 = vsel %vm320, %v318, %v315
    %v322 = vadd.f32 %v74, 1.0
    %v323 = vlog2.pop %v322
    %v324 = vmul.f32 %v323, 0.6931472
    %v325 = vmul.f32 -0.5, %v74
    %v326 = vadd.f32 %v325, 1.0
    %v327 = vmul.f32 %v326, %v74
    %v328 = vand.u32 2147483647, %v74
    %vm329 = vcmp.lt.f32.partialorder %v328, 0.0004427343
    %v330 = vsel %vm329, %v327, %v324
    %v331 = vadd.f32 %v75, 1.0
    %v332 = vlog2.pop %v331
    %v333 = vmul.f32 %v332, 0.6931472
    %v334 = vmul.f32 -0.5, %v75
    %v335 = vadd.f32 %v334, 1.0
    %v336 = vmul.f32 %v335, %v75
    %v337 = vand.u32 2147483647, %v75
    %vm338 = vcmp.lt.f32.partialorder %v337, 0.0004427343
    %v339 = vsel %vm338, %v336, %v333
    %v340 = vadd.f32 %v76, 1.0
    %v341 = vlog2.pop %v340
    %v342 = vmul.f32 %v341, 0.6931472
    %v343 = vmul.f32 -0.5, %v76
    %v344 = vadd.f32 %v343, 1.0
    %v345 = vmul.f32 %v344, %v76
    %v346 = vand.u32 2147483647, %v76
    %vm347 = vcmp.lt.f32.partialorder %v346, 0.0004427343
    %v348 = vsel %vm347, %v345, %v342
    %v349 = vadd.f32 %v77, 1.0
    %v350 = vlog2.pop %v349
    %v351 = vmul.f32 %v350, 0.6931472
    %v352 = vmul.f32 -0.5, %v77
    %v353 = vadd.f32 %v352, 1.0
    %v354 = vmul.f32 %v353, %v77
    %v355 = vand.u32 2147483647, %v77
    %vm356 = vcmp.lt.f32.partialorder %v355, 0.0004427343
    %v357 = vsel %vm356, %v354, %v351
    %v358 = vadd.f32 %v78, 1.0
    %v359 = vlog2.pop %v358
    %v360 = vmul.f32 %v359, 0.6931472
    %v361 = vmul.f32 -0.5, %v78
    %v362 = vadd.f32 %v361, 1.0
    %v363 = vmul.f32 %v362, %v78
    %v364 = vand.u32 2147483647, %v78
    %vm365 = vcmp.lt.f32.partialorder %v364, 0.0004427343
    %v366 = vsel %vm365, %v363, %v360
    %v367 = vadd.f32 %v79, 1.0
    %v368 = vlog2.pop %v367
    %v369 = vmul.f32 %v368, 0.6931472
    %v370 = vmul.f32 -0.5, %v79
    %v371 = vadd.f32 %v370, 1.0
    %v372 = vmul.f32 %v371, %v79
    %v373 = vand.u32 2147483647, %v79
    %vm374 = vcmp.lt.f32.partialorder %v373, 0.0004427343
    %v375 = vsel %vm374, %v372, %v369
    %v376 = vadd.f32 %v80, 1.0
    %v377 = vlog2.pop %v376
    %v378 = vmul.f32 %v377, 0.6931472
    %v379 = vmul.f32 -0.5, %v80
    %v380 = vadd.f32 %v379, 1.0
    %v381 = vmul.f32 %v380, %v80
    %v382 = vand.u32 2147483647, %v80
    %vm383 = vcmp.lt.f32.partialorder %v382, 0.0004427343
    %v384 = vsel %vm383, %v381, %v378
    %v385 = vadd.f32 %v81, 1.0
    %v386 = vlog2.pop %v385
    %v387 = vmul.f32 %v386, 0.6931472
    %v388 = vmul.f32 -0.5, %v81
    %v389 = vadd.f32 %v388, 1.0
    %v390 = vmul.f32 %v389, %v81
    %v391 = vand.u32 2147483647, %v81
    %vm392 = vcmp.lt.f32.partialorder %v391, 0.0004427343
    %v393 = vsel %vm392, %v390, %v387
    %v394 = vadd.f32 %v82, 1.0
    %v395 = vlog2.pop %v394
    %v396 = vmul.f32 %v395, 0.6931472
    %v397 = vmul.f32 -0.5, %v82
    %v398 = vadd.f32 %v397, 1.0
    %v399 = vmul.f32 %v398, %v82
    %v400 = vand.u32 2147483647, %v82
    %vm401 = vcmp.lt.f32.partialorder %v400, 0.0004427343
    %v402 = vsel %vm401, %v399, %v396
    %v403 = vadd.f32 %v83, 1.0
    %v404 = vlog2.pop %v403
    %v405 = vmul.f32 %v404, 0.6931472
    %v406 = vmul.f32 -0.5, %v83
    %v407 = vadd.f32 %v406, 1.0
    %v408 = vmul.f32 %v407, %v83
    %v409 = vand.u32 2147483647, %v83
    %vm410 = vcmp.lt.f32.partialorder %v409, 0.0004427343
    %v411 = vsel %vm410, %v408, %v405
    %v412 = vadd.f32 %v84, 1.0
    %v413 = vlog2.pop %v412
    %v414 = vmul.f32 %v413, 0.6931472
    %v415 = vmul.f32 -0.5, %v84
    %v416 = vadd.f32 %v415, 1.0
    %v417 = vmul.f32 %v416, %v84
    %v418 = vand.u32 2147483647, %v84
    %vm419 = vcmp.lt.f32.partialorder %v418, 0.0004427343
    %v420 = vsel %vm419, %v417, %v414
    %v421 = vadd.f32 %v85, 1.0
    %v422 = vlog2.pop %v421
    %v423 = vmul.f32 %v422, 0.6931472
    %v424 = vmul.f32 -0.5, %v85
    %v425 = vadd.f32 %v424, 1.0
    %v426 = vmul.f32 %v425, %v85
    %v427 = vand.u32 2147483647, %v85
    %vm428 = vcmp.lt.f32.partialorder %v427, 0.0004427343
    %v429 = vsel %vm428, %v426, %v423
    %v430 = vadd.f32 %v86, 1.0
    %v431 = vlog2.pop %v430
    %v432 = vmul.f32 %v431, 0.6931472
    %v433 = vmul.f32 -0.5, %v86
    %v434 = vadd.f32 %v433, 1.0
    %v435 = vmul.f32 %v434, %v86
    %v436 = vand.u32 2147483647, %v86
    %vm437 = vcmp.lt.f32.partialorder %v436, 0.0004427343
    %v438 = vsel %vm437, %v435, %v432
    %v439 = vadd.f32 %v87, 1.0
    %v440 = vlog2.pop %v439
    %v441 = vmul.f32 %v440, 0.6931472
    %v442 = vmul.f32 -0.5, %v87
    %v443 = vadd.f32 %v442, 1.0
    %v444 = vmul.f32 %v443, %v87
    %v445 = vand.u32 2147483647, %v87
    %vm446 = vcmp.lt.f32.partialorder %v445, 0.0004427343
    %v447 = vsel %vm446, %v444, %v441
    %v448 = vadd.f32 %v88, 1.0
    %v449 = vlog2.pop %v448
    %v450 = vmul.f32 %v449, 0.6931472
    %v451 = vmul.f32 -0.5, %v88
    %v452 = vadd.f32 %v451, 1.0
    %v453 = vmul.f32 %v452, %v88
    %v454 = vand.u32 2147483647, %v88
    %vm455 = vcmp.lt.f32.partialorder %v454, 0.0004427343
    %v456 = vsel %vm455, %v453, %v450
    %v457 = vadd.f32 %v89, 1.0
    %v458 = vlog2.pop %v457
    %v459 = vmul.f32 %v458, 0.6931472
    %v460 = vmul.f32 -0.5, %v89
    %v461 = vadd.f32 %v460, 1.0
    %v462 = vmul.f32 %v461, %v89
    %v463 = vand.u32 2147483647, %v89
    %vm464 = vcmp.lt.f32.partialorder %v463, 0.0004427343
    %v465 = vsel %vm464, %v462, %v459
    %v466 = vadd.f32 %v90, 1.0
    %v467 = vlog2.pop %v466
    %v468 = vmul.f32 %v467, 0.6931472
    %v469 = vmul.f32 -0.5, %v90
    %v470 = vadd.f32 %v469, 1.0
    %v471 = vmul.f32 %v470, %v90
    %v472 = vand.u32 2147483647, %v90
    %vm473 = vcmp.lt.f32.partialorder %v472, 0.0004427343
    %v474 = vsel %vm473, %v471, %v468
    %v475 = vadd.f32 %v91, 1.0
    %v476 = vlog2.pop %v475
    %v477 = vmul.f32 %v476, 0.6931472
    %v478 = vmul.f32 -0.5, %v91
    %v479 = vadd.f32 %v478, 1.0
    %v480 = vmul.f32 %v479, %v91
    %v481 = vand.u32 2147483647, %v91
    %vm482 = vcmp.lt.f32.partialorder %v481, 0.0004427343
    %v483 = vsel %vm482, %v480, %v477
    %v484 = vadd.f32 %v92, 1.0
    %v485 = vlog2.pop %v484
    %v486 = vmul.f32 %v485, 0.6931472
    %v487 = vmul.f32 -0.5, %v92
    %v488 = vadd.f32 %v487, 1.0
    %v489 = vmul.f32 %v488, %v92
    %v490 = vand.u32 2147483647, %v92
    %vm491 = vcmp.lt.f32.partialorder %v490, 0.0004427343
    %v492 = vsel %vm491, %v489, %v486
    %v493 = vadd.f32 %v93, 1.0
    %v494 = vlog2.pop %v493
    %v495 = vmul.f32 %v494, 0.6931472
    %v496 = vmul.f32 -0.5, %v93
    %v497 = vadd.f32 %v496, 1.0
    %v498 = vmul.f32 %v497, %v93
    %v499 = vand.u32 2147483647, %v93
    %vm500 = vcmp.lt.f32.partialorder %v499, 0.0004427343
    %v501 = vsel %vm500, %v498, %v495
    %v502 = vadd.f32 %v94, 1.0
    %v503 = vlog2.pop %v502
    %v504 = vmul.f32 %v503, 0.6931472
    %v505 = vmul.f32 -0.5, %v94
    %v506 = vadd.f32 %v505, 1.0
    %v507 = vmul.f32 %v506, %v94
    %v508 = vand.u32 2147483647, %v94
    %vm509 = vcmp.lt.f32.partialorder %v508, 0.0004427343
    %v510 = vsel %vm509, %v507, %v504
    %v511 = vadd.f32 %v95, 1.0
    %v512 = vlog2.pop %v511
    %v513 = vmul.f32 %v512, 0.6931472
    %v514 = vmul.f32 -0.5, %v95
    %v515 = vadd.f32 %v514, 1.0
    %v516 = vmul.f32 %v515, %v95
    %v517 = vand.u32 2147483647, %v95
    %vm518 = vcmp.lt.f32.partialorder %v517, 0.0004427343
    %v519 = vsel %vm518, %v516, %v513
    %v520 = vadd.f32 %v96, 1.0
    %v521 = vlog2.pop %v520
    %v522 = vmul.f32 %v521, 0.6931472
    %v523 = vmul.f32 -0.5, %v96
    %v524 = vadd.f32 %v523, 1.0
    %v525 = vmul.f32 %v524, %v96
    %v526 = vand.u32 2147483647, %v96
    %vm527 = vcmp.lt.f32.partialorder %v526, 0.0004427343
    %v528 = vsel %vm527, %v525, %v522
    %v529 = vadd.f32 %v97, 1.0
    %v530 = vlog2.pop %v529
    %v531 = vmul.f32 %v530, 0.6931472
    %v532 = vmul.f32 -0.5, %v97
    %v533 = vadd.f32 %v532, 1.0
    %v534 = vmul.f32 %v533, %v97
    %v535 = vand.u32 2147483647, %v97
    %vm536 = vcmp.lt.f32.partialorder %v535, 0.0004427343
    %v537 = vsel %vm536, %v534, %v531
    %v538 = vadd.f32 %v98, 1.0
    %v539 = vlog2.pop %v538
    %v540 = vmul.f32 %v539, 0.6931472
    %v541 = vmul.f32 -0.5, %v98
    %v542 = vadd.f32 %v541, 1.0
    %v543 = vmul.f32 %v542, %v98
    %v544 = vand.u32 2147483647, %v98
    %vm545 = vcmp.lt.f32.partialorder %v544, 0.0004427343
    %v546 = vsel %vm545, %v543, %v540
    %v547 = vadd.f32 %v99, 1.0
    %v548 = vlog2.pop %v547
    %v549 = vmul.f32 %v548, 0.6931472
    %v550 = vmul.f32 -0.5, %v99
    %v551 = vadd.f32 %v550, 1.0
    %v552 = vmul.f32 %v551, %v99
    %v553 = vand.u32 2147483647, %v99
    %vm554 = vcmp.lt.f32.partialorder %v553, 0.0004427343
    %v555 = vsel %vm554, %v552, %v549
    %v556 = vadd.f32 %v100, 1.0
    %v557 = vlog2.pop %v556
    %v558 = vmul.f32 %v557, 0.6931472
    %v559 = vmul.f32 -0.5, %v100
    %v560 = vadd.f32 %v559, 1.0
    %v561 = vmul.f32 %v560, %v100
    %v562 = vand.u32 2147483647, %v100
    %vm563 = vcmp.lt.f32.partialorder %v562, 0.0004427343
    %v564 = vsel %vm563, %v561, %v558
    %v565 = vadd.f32 %v101, 1.0
    %v566 = vlog2.pop %v565
    %v567 = vmul.f32 %v566, 0.6931472
    %v568 = vmul.f32 -0.5, %v101
    %v569 = vadd.f32 %v568, 1.0
    %v570 = vmul.f32 %v569, %v101
    %v571 = vand.u32 2147483647, %v101
    %vm572 = vcmp.lt.f32.partialorder %v571, 0.0004427343
    %v573 = vsel %vm572, %v570, %v567
    %v574 = vadd.f32 %v102, 1.0
    %v575 = vlog2.pop %v574
    %v576 = vmul.f32 %v575, 0.6931472
    %v577 = vmul.f32 -0.5, %v102
    %v578 = vadd.f32 %v577, 1.0
    %v579 = vmul.f32 %v578, %v102
    %v580 = vand.u32 2147483647, %v102
    %vm581 = vcmp.lt.f32.partialorder %v580, 0.0004427343
    %v582 = vsel %vm581, %v579, %v576
    %v583 = vadd.f32 %v103, 1.0
    %v584 = vlog2.pop %v583
    %v585 = vmul.f32 %v584, 0.6931472
    %v586 = vmul.f32 -0.5, %v103
    %v587 = vadd.f32 %v586, 1.0
    %v588 = vmul.f32 %v587, %v103
    %v589 = vand.u32 2147483647, %v103
    %vm590 = vcmp.lt.f32.partialorder %v589, 0.0004427343
    %v591 = vsel %vm590, %v588, %v585
    %v592 = vadd.f32 %v104, 1.0
    %v593 = vlog2.pop %v592
    %v594 = vmul.f32 %v593, 0.6931472
    %v595 = vmul.f32 -0.5, %v104
    %v596 = vadd.f32 %v595, 1.0
    %v597 = vmul.f32 %v596, %v104
    %v598 = vand.u32 2147483647, %v104
    %vm599 = vcmp.lt.f32.partialorder %v598, 0.0004427343
    %v600 = vsel %vm599, %v597, %v594
    %v601 = vadd.f32 %v105, 1.0
    %v602 = vlog2.pop %v601
    %v603 = vmul.f32 %v602, 0.6931472
    %v604 = vmul.f32 -0.5, %v105
    %v605 = vadd.f32 %v604, 1.0
    %v606 = vmul.f32 %v605, %v105
    %v607 = vand.u32 2147483647, %v105
    %vm608 = vcmp.lt.f32.partialorder %v607, 0.0004427343
    %v609 = vsel %vm608, %v606, %v603
    %v610 = vadd.f32 %v106, 1.0
    %v611 = vlog2.pop %v610
    %v612 = vmul.f32 %v611, 0.6931472
    %v613 = vmul.f32 -0.5, %v106
    %v614 = vadd.f32 %v613, 1.0
    %v615 = vmul.f32 %v614, %v106
    %v616 = vand.u32 2147483647, %v106
    %vm617 = vcmp.lt.f32.partialorder %v616, 0.0004427343
    %v618 = vsel %vm617, %v615, %v612
    %v619 = vadd.f32 %v107, 1.0
    %v620 = vlog2.pop %v619
    %v621 = vmul.f32 %v620, 0.6931472
    %v622 = vmul.f32 -0.5, %v107
    %v623 = vadd.f32 %v622, 1.0
    %v624 = vmul.f32 %v623, %v107
    %v625 = vand.u32 2147483647, %v107
    %vm626 = vcmp.lt.f32.partialorder %v625, 0.0004427343
    %v627 = vsel %vm626, %v624, %v621
    %v628 = vadd.f32 %v108, 1.0
    %v629 = vlog2.pop %v628
    %v630 = vmul.f32 %v629, 0.6931472
    %v631 = vmul.f32 -0.5, %v108
    %v632 = vadd.f32 %v631, 1.0
    %v633 = vmul.f32 %v632, %v108
    %v634 = vand.u32 2147483647, %v108
    %vm635 = vcmp.lt.f32.partialorder %v634, 0.0004427343
    %v636 = vsel %vm635, %v633, %v630
    %v637 = vadd.f32 %v109, 1.0
    %v638 = vlog2.pop %v637
    %v639 = vmul.f32 %v638, 0.6931472
    %v640 = vmul.f32 -0.5, %v109
    %v641 = vadd.f32 %v640, 1.0
    %v642 = vmul.f32 %v641, %v109
    %v643 = vand.u32 2147483647, %v109
    %vm644 = vcmp.lt.f32.partialorder %v643, 0.0004427343
    %v645 = vsel %vm644, %v642, %v639
    %v646 = vadd.f32 %v110, 1.0
    %v647 = vlog2.pop %v646
    %v648 = vmul.f32 %v647, 0.6931472
    %v649 = vmul.f32 -0.5, %v110
    %v650 = vadd.f32 %v649, 1.0
    %v651 = vmul.f32 %v650, %v110
    %v652 = vand.u32 2147483647, %v110
    %vm653 = vcmp.lt.f32.partialorder %v652, 0.0004427343
    %v654 = vsel %vm653, %v651, %v648
    %v655 = vadd.f32 %v111, 1.0
    %v656 = vlog2.pop %v655
    %v657 = vmul.f32 %v656, 0.6931472
    %v658 = vmul.f32 -0.5, %v111
    %v659 = vadd.f32 %v658, 1.0
    %v660 = vmul.f32 %v659, %v111
    %v661 = vand.u32 2147483647, %v111
    %vm662 = vcmp.lt.f32.partialorder %v661, 0.0004427343
    %v663 = vsel %vm662, %v660, %v657
    %v664 = vadd.f32 %v112, 1.0
    %v665 = vlog2.pop %v664
    %v666 = vmul.f32 %v665, 0.6931472
    %v667 = vmul.f32 -0.5, %v112
    %v668 = vadd.f32 %v667, 1.0
    %v669 = vmul.f32 %v668, %v112
    %v670 = vand.u32 2147483647, %v112
    %vm671 = vcmp.lt.f32.partialorder %v670, 0.0004427343
    %v672 = vsel %vm671, %v669, %v666
    %v673 = vadd.f32 %v113, 1.0
    %v674 = vlog2.pop %v673
    %v675 = vmul.f32 %v674, 0.6931472
    %v676 = vmul.f32 -0.5, %v113
    %v677 = vadd.f32 %v676, 1.0
    %v678 = vmul.f32 %v677, %v113
    %v679 = vand.u32 2147483647, %v113
    %vm680 = vcmp.lt.f32.partialorder %v679, 0.0004427343
    %v681 = vsel %vm680, %v678, %v675
    %v682 = vadd.f32 %v114, 1.0
    %v683 = vlog2.pop %v682
    %v684 = vmul.f32 %v683, 0.6931472
    %v685 = vmul.f32 -0.5, %v114
    %v686 = vadd.f32 %v685, 1.0
    %v687 = vmul.f32 %v686, %v114
    %v688 = vand.u32 2147483647, %v114
    %vm689 = vcmp.lt.f32.partialorder %v688, 0.0004427343
    %v690 = vsel %vm689, %v687, %v684
    %v691 = vadd.f32 %v115, 1.0
    %v692 = vlog2.pop %v691
    %v693 = vmul.f32 %v692, 0.6931472
    %v694 = vmul.f32 -0.5, %v115
    %v695 = vadd.f32 %v694, 1.0
    %v696 = vmul.f32 %v695, %v115
    %v697 = vand.u32 2147483647, %v115
    %vm698 = vcmp.lt.f32.partialorder %v697, 0.0004427343
    %v699 = vsel %vm698, %v696, %v693
    %v700 = vadd.f32 %v116, 1.0
    %v701 = vlog2.pop %v700
    %v702 = vmul.f32 %v701, 0.6931472
    %v703 = vmul.f32 -0.5, %v116
    %v704 = vadd.f32 %v703, 1.0
    %v705 = vmul.f32 %v704, %v116
    %v706 = vand.u32 2147483647, %v116
    %vm707 = vcmp.lt.f32.partialorder %v706, 0.0004427343
    %v708 = vsel %vm707, %v705, %v702
    %v709 = vadd.f32 %v117, 1.0
    %v710 = vlog2.pop %v709
    %v711 = vmul.f32 %v710, 0.6931472
    %v712 = vmul.f32 -0.5, %v117
    %v713 = vadd.f32 %v712, 1.0
    %v714 = vmul.f32 %v713, %v117
    %v715 = vand.u32 2147483647, %v117
    %vm716 = vcmp.lt.f32.partialorder %v715, 0.0004427343
    %v717 = vsel %vm716, %v714, %v711
    %v718 = vadd.f32 %v118, 1.0
    %v719 = vlog2.pop %v718
    %v720 = vmul.f32 %v719, 0.6931472
    %v721 = vmul.f32 -0.5, %v118
    %v722 = vadd.f32 %v721, 1.0
    %v723 = vmul.f32 %v722, %v118
    %v724 = vand.u32 2147483647, %v118
    %vm725 = vcmp.lt.f32.partialorder %v724, 0.0004427343
    %v726 = vsel %vm725, %v723, %v720
    %v727 = vadd.f32 %v119, 1.0
    %v728 = vlog2.pop %v727
    %v729 = vmul.f32 %v728, 0.6931472
    %v730 = vmul.f32 -0.5, %v119
    %v731 = vadd.f32 %v730, 1.0
    %v732 = vmul.f32 %v731, %v119
    %v733 = vand.u32 2147483647, %v119
    %vm734 = vcmp.lt.f32.partialorder %v733, 0.0004427343
    %v735 = vsel %vm734, %v732, %v729
    %v736 = vadd.f32 %v120, 1.0
    %v737 = vlog2.pop %v736
    %v738 = vmul.f32 %v737, 0.6931472
    %v739 = vmul.f32 -0.5, %v120
    %v740 = vadd.f32 %v739, 1.0
    %v741 = vmul.f32 %v740, %v120
    %v742 = vand.u32 2147483647, %v120
    %vm743 = vcmp.lt.f32.partialorder %v742, 0.0004427343
    %v744 = vsel %vm743, %v741, %v738
    %v745 = vadd.f32 %v121, 1.0
    %v746 = vlog2.pop %v745
    %v747 = vmul.f32 %v746, 0.6931472
    %v748 = vmul.f32 -0.5, %v121
    %v749 = vadd.f32 %v748, 1.0
    %v750 = vmul.f32 %v749, %v121
    %v751 = vand.u32 2147483647, %v121
    %vm752 = vcmp.lt.f32.partialorder %v751, 0.0004427343
    %v753 = vsel %vm752, %v750, %v747
    %v754 = vadd.f32 %v122, 1.0
    %v755 = vlog2.pop %v754
    %v756 = vmul.f32 %v755, 0.6931472
    %v757 = vmul.f32 -0.5, %v122
    %v758 = vadd.f32 %v757, 1.0
    %v759 = vmul.f32 %v758, %v122
    %v760 = vand.u32 2147483647, %v122
    %vm761 = vcmp.lt.f32.partialorder %v760, 0.0004427343
    %v762 = vsel %vm761, %v759, %v756
    %v763 = vadd.f32 %v123, 1.0
    %v764 = vlog2.pop %v763
    %v765 = vmul.f32 %v764, 0.6931472
    %v766 = vmul.f32 -0.5, %v123
    %v767 = vadd.f32 %v766, 1.0
    %v768 = vmul.f32 %v767, %v123
    %v769 = vand.u32 2147483647, %v123
    %vm770 = vcmp.lt.f32.partialorder %v769, 0.0004427343
    %v771 = vsel %vm770, %v768, %v765
    %v772 = vadd.f32 %v124, 1.0
    %v773 = vlog2.pop %v772
    %v774 = vmul.f32 %v773, 0.6931472
    %v775 = vmul.f32 -0.5, %v124
    %v776 = vadd.f32 %v775, 1.0
    %v777 = vmul.f32 %v776, %v124
    %v778 = vand.u32 2147483647, %v124
    %vm779 = vcmp.lt.f32.partialorder %v778, 0.0004427343
    %v780 = vsel %vm779, %v777, %v774
    %v781 = vadd.f32 %v125, 1.0
    %v782 = vlog2.pop %v781
    %v783 = vmul.f32 %v782, 0.6931472
    %v784 = vmul.f32 -0.5, %v125
    %v785 = vadd.f32 %v784, 1.0
    %v786 = vmul.f32 %v785, %v125
    %v787 = vand.u32 2147483647, %v125
    %vm788 = vcmp.lt.f32.partialorder %v787, 0.0004427343
    %v789 = vsel %vm788, %v786, %v783
    %v790 = vadd.f32 %v126, 1.0
    %v791 = vlog2.pop %v790
    %v792 = vmul.f32 %v791, 0.6931472
    %v793 = vmul.f32 -0.5, %v126
    %v794 = vadd.f32 %v793, 1.0
    %v795 = vmul.f32 %v794, %v126
    %v796 = vand.u32 2147483647, %v126
    %vm797 = vcmp.lt.f32.partialorder %v796, 0.0004427343
    %v798 = vsel %vm797, %v795, %v792
    %v799 = vpack.c.bf16 %v249, %v231
    %v800 = vpack.c.bf16 %v258, %v240
    %v801 = vpack.c.bf16 %v285, %v267
    %v802 = vpack.c.bf16 %v294, %v276
    %v803 = vpack.c.bf16 %v321, %v303
    %v804 = vpack.c.bf16 %v330, %v312
    %v805 = vpack.c.bf16 %v357, %v339
    %v806 = vpack.c.bf16 %v366, %v348
    %v807 = vpack.c.bf16 %v393, %v375
    %v808 = vpack.c.bf16 %v402, %v384
    %v809 = vpack.c.bf16 %v429, %v411
    %v810 = vpack.c.bf16 %v438, %v420
    %v811 = vpack.c.bf16 %v465, %v447
    %v812 = vpack.c.bf16 %v474, %v456
    %v813 = vpack.c.bf16 %v501, %v483
    %v814 = vpack.c.bf16 %v510, %v492
    %v815 = vpack.c.bf16 %v537, %v519
    %v816 = vpack.c.bf16 %v546, %v528
    %v817 = vpack.c.bf16 %v573, %v555
    %v818 = vpack.c.bf16 %v582, %v564
    %v819 = vpack.c.bf16 %v609, %v591
    %v820 = vpack.c.bf16 %v618, %v600
    %v821 = vpack.c.bf16 %v645, %v627
    %v822 = vpack.c.bf16 %v654, %v636
    %v823 = vpack.c.bf16 %v681, %v663
    %v824 = vpack.c.bf16 %v690, %v672
    %v825 = vpack.c.bf16 %v717, %v699
    %v826 = vpack.c.bf16 %v726, %v708
    %v827 = vpack.c.bf16 %v753, %v735
    %v828 = vpack.c.bf16 %v762, %v744
    %v829 = vpack.c.bf16 %v789, %v771
    %v830 = vpack.c.bf16 %v798, %v780
    %v831 = vld [vmem:[#allocation5] sm:$0xf]
    %v832 = vld [vmem:[#allocation5 + $0x4] sm:$0xf]
    %v833 = vld [vmem:[#allocation5 + $0x8] sm:$0xf]
    %v834 = vld [vmem:[#allocation5 + $0xc] sm:$0xf]
    %v835 = vld [vmem:[#allocation5 + $0x10] sm:$0xf]
    %v836 = vld [vmem:[#allocation5 + $0x14] sm:$0xf]
    %v837 = vld [vmem:[#allocation5 + $0x18] sm:$0xf]
    %v838 = vld [vmem:[#allocation5 + $0x1c] sm:$0xf]
    %v839 = vld [vmem:[#allocation5 + $0x20] sm:$0xf]
    %v840 = vld [vmem:[#allocation5 + $0x24] sm:$0xf]
    %v841 = vld [vmem:[#allocation5 + $0x28] sm:$0xf]
    %v842 = vld [vmem:[#allocation5 + $0x2c] sm:$0xf]
    %v843 = vld [vmem:[#allocation5 + $0x30] sm:$0xf]
    %v844 = vld [vmem:[#allocation5 + $0x34] sm:$0xf]
    %v845 = vld [vmem:[#allocation5 + $0x38] sm:$0xf]
    %v846 = vld [vmem:[#allocation5 + $0x3c] sm:$0xf]
    %v847 = vld [vmem:[#allocation5 + $0x40] sm:$0xf]
    %v848 = vld [vmem:[#allocation5 + $0x44] sm:$0xf]
    %v849 = vld [vmem:[#allocation5 + $0x48] sm:$0xf]
    %v850 = vld [vmem:[#allocation5 + $0x4c] sm:$0xf]
    %v851 = vld [vmem:[#allocation5 + $0x50] sm:$0xf]
    %v852 = vld [vmem:[#allocation5 + $0x54] sm:$0xf]
    %v853 = vld [vmem:[#allocation5 + $0x58] sm:$0xf]
    %v854 = vld [vmem:[#allocation5 + $0x5c] sm:$0xf]
    %v855 = vld [vmem:[#allocation5 + $0x60] sm:$0xf]
    %v856 = vld [vmem:[#allocation5 + $0x64] sm:$0xf]
    %v857 = vld [vmem:[#allocation5 + $0x68] sm:$0xf]
    %v858 = vld [vmem:[#allocation5 + $0x6c] sm:$0xf]
    %v859 = vld [vmem:[#allocation5 + $0x70] sm:$0xf]
    %v860 = vld [vmem:[#allocation5 + $0x74] sm:$0xf]
    %v861 = vld [vmem:[#allocation5 + $0x78] sm:$0xf]
    %v862 = vld [vmem:[#allocation5 + $0x7c] sm:$0xf]
    %v863 = vld [vmem:[%s2] sm:$0x1]
    %v865 = vlaneseq
    %v866 = vshrl.u32 %v865, 7
    %v867 = vsub.s32 0, %v866
    %v868 = vrot.slane %v863, %v867
    %v902 = vunpack.c.l.b16 %v831
    %v903 = vunpack.c.l.b16 %v832
    %v904 = vunpack.c.l.b16 %v833
    %v905 = vunpack.c.l.b16 %v834
    %v906 = vunpack.c.l.b16 %v835
    %v907 = vunpack.c.l.b16 %v836
    %v908 = vunpack.c.l.b16 %v837
    %v909 = vunpack.c.l.b16 %v838
    %v910 = vunpack.c.l.b16 %v839
    %v911 = vunpack.c.l.b16 %v840
    %v912 = vunpack.c.l.b16 %v841
    %v913 = vunpack.c.l.b16 %v842
    %v914 = vunpack.c.l.b16 %v843
    %v915 = vunpack.c.l.b16 %v844
    %v916 = vunpack.c.l.b16 %v845
    %v917 = vunpack.c.l.b16 %v846
    %v918 = vunpack.c.l.b16 %v847
    %v919 = vunpack.c.l.b16 %v848
    %v920 = vunpack.c.l.b16 %v849
    %v921 = vunpack.c.l.b16 %v850
    %v922 = vunpack.c.l.b16 %v851
    %v923 = vunpack.c.l.b16 %v852
    %v924 = vunpack.c.l.b16 %v853
    %v925 = vunpack.c.l.b16 %v854
    %v926 = vunpack.c.l.b16 %v855
    %v927 = vunpack.c.l.b16 %v856
    %v928 = vunpack.c.l.b16 %v857
    %v929 = vunpack.c.l.b16 %v858
    %v930 = vunpack.c.l.b16 %v859
    %v931 = vunpack.c.l.b16 %v860
    %v932 = vunpack.c.l.b16 %v861
    %v933 = vunpack.c.l.b16 %v862
    %v934 = vpack.c.b16 %v903, %v902
    %v935 = vpack.c.b16 %v905, %v904
    %v936 = vpack.c.b16 %v907, %v906
    %v937 = vpack.c.b16 %v909, %v908
    %v938 = vpack.c.b16 %v911, %v910
    %v939 = vpack.c.b16 %v913, %v912
    %v940 = vpack.c.b16 %v915, %v914
    %v941 = vpack.c.b16 %v917, %v916
    %v942 = vpack.c.b16 %v919, %v918
    %v943 = vpack.c.b16 %v921, %v920
    %v944 = vpack.c.b16 %v923, %v922
    %v945 = vpack.c.b16 %v925, %v924
    %v946 = vpack.c.b16 %v927, %v926
    %v947 = vpack.c.b16 %v929, %v928
    %v948 = vpack.c.b16 %v931, %v930
    %v949 = vpack.c.b16 %v933, %v932
    %966 = vmatprep.subr.bf16.mxu0 0
    %967 = vmatpush1.bf16.msra.mxu0 %v934
    %968 = vmatprep.subr.bf16.mxu0 0
    %969 = vmatpush1.bf16.msra.mxu0 %v935
    %970 = vmatprep.subr.bf16.mxu0 0
    %971 = vmatpush1.bf16.msra.mxu0 %v936
    %972 = vmatprep.subr.bf16.mxu0 0
    %973 = vmatpush1.bf16.msra.mxu0 %v937
    %974 = vmatprep.subr.bf16.mxu0 0
    %975 = vmatpush1.bf16.msra.mxu0 %v938
    %976 = vmatprep.subr.bf16.mxu0 0
    %977 = vmatpush1.bf16.msra.mxu0 %v939
    %978 = vmatprep.subr.bf16.mxu0 0
    %979 = vmatpush1.bf16.msra.mxu0 %v940
    %980 = vmatprep.subr.bf16.mxu0 0
    %981 = vmatpush1.bf16.msra.mxu0 %v941
    %982 = vmatprep.subr.bf16.mxu0 0
    %983 = vmatpush1.bf16.msra.mxu0 %v942
    %984 = vmatprep.subr.bf16.mxu0 0
    %985 = vmatpush1.bf16.msra.mxu0 %v943
    %986 = vmatprep.subr.bf16.mxu0 0
    %987 = vmatpush1.bf16.msra.mxu0 %v944
    %988 = vmatprep.subr.bf16.mxu0 0
    %989 = vmatpush1.bf16.msra.mxu0 %v945
    %990 = vmatprep.subr.bf16.mxu0 0
    %991 = vmatpush1.bf16.msra.mxu0 %v946
    %992 = vmatprep.subr.bf16.mxu0 0
    %993 = vmatpush1.bf16.msra.mxu0 %v947
    %994 = vmatprep.subr.bf16.mxu0 0
    %995 = vmatpush1.bf16.msra.mxu0 %v948
    %996 = vmatprep.subr.bf16.mxu0 0
    %997 = vmatpush1.bf16.msra.mxu0 %v949
    %998 = vmatprep.mubr.bf16.mxu0 %v800
    %999 = vmatmul.mubr.bf16.gmra.mrb[0].mxu0 %v799
    %v1000 = vpop.f32.mrb[0].mxu0
    %v1001 = vadd.f32 %v868, %v1000
    %v1002 = vpop.f32.mrb[0].mxu0
    %v1003 = vpop.f32.mrb[0].mxu0
    %v1004 = vadd.f32 %v868, %v1003
    %v1005 = vpop.f32.mrb[0].mxu0
    %1006 = vmatprep.mubr.bf16.mxu0 %v802
    %1007 = vmatmul.mubr.bf16.gmra.mrb[0].mxu0 %v801
    %v1008 = vpop.f32.mrb[0].mxu0
    %v1009 = vadd.f32 %v868, %v1008
    %v1010 = vpop.f32.mrb[0].mxu0
    %v1011 = vpop.f32.mrb[0].mxu0
    %v1012 = vadd.f32 %v868, %v1011
    %v1013 = vpop.f32.mrb[0].mxu0
    %1014 = vmatprep.mubr.bf16.mxu0 %v804
    %1015 = vmatmul.mubr.bf16.gmra.mrb[0].mxu0 %v803
    %v1016 = vpop.f32.mrb[0].mxu0
    %v1017 = vadd.f32 %v868, %v1016
    %v1018 = vpop.f32.mrb[0].mxu0
    %v1019 = vpop.f32.mrb[0].mxu0
    %v1020 = vadd.f32 %v868, %v1019
    %v1021 = vpop.f32.mrb[0].mxu0
    %1022 = vmatprep.mubr.bf16.mxu0 %v806
    %1023 = vmatmul.mubr.bf16.gmra.mrb[0].mxu0 %v805
    %v1024 = vpop.f32.mrb[0].mxu0
    %v1025 = vadd.f32 %v868, %v1024
    %v1026 = vpop.f32.mrb[0].mxu0
    %v1027 = vpop.f32.mrb[0].mxu0
    %v1028 = vadd.f32 %v868, %v1027
    %v1029 = vpop.f32.mrb[0].mxu0
    %1030 = vmatprep.mubr.bf16.mxu0 %v808
    %1031 = vmatmul.mubr.bf16.gmra.mrb[0].mxu0 %v807
    %v1032 = vpop.f32.mrb[0].mxu0
    %v1033 = vadd.f32 %v868, %v1032
    %v1034 = vpop.f32.mrb[0].mxu0
    %v1035 = vpop.f32.mrb[0].mxu0
    %v1036 = vadd.f32 %v868, %v1035
    %v1037 = vpop.f32.mrb[0].mxu0
    %1038 = vmatprep.mubr.bf16.mxu0 %v810
    %1039 = vmatmul.mubr.bf16.gmra.mrb[0].mxu0 %v809
    %v1040 = vpop.f32.mrb[0].mxu0
    %v1041 = vadd.f32 %v868, %v1040
    %v1042 = vpop.f32.mrb[0].mxu0
    %v1043 = vpop.f32.mrb[0].mxu0
    %v1044 = vadd.f32 %v868, %v1043
    %v1045 = vpop.f32.mrb[0].mxu0
    %1046 = vmatprep.mubr.bf16.mxu0 %v812
    %1047 = vmatmul.mubr.bf16.gmra.mrb[0].mxu0 %v811
    %v1048 = vpop.f32.mrb[0].mxu0
    %v1049 = vadd.f32 %v868, %v1048
    %v1050 = vpop.f32.mrb[0].mxu0
    %v1051 = vpop.f32.mrb[0].mxu0
    %v1052 = vadd.f32 %v868, %v1051
    %v1053 = vpop.f32.mrb[0].mxu0
    %1054 = vmatprep.mubr.bf16.mxu0 %v814
    %1055 = vmatmul.mubr.bf16.gmra.mrb[0].mxu0 %v813
    %v1056 = vpop.f32.mrb[0].mxu0
    %v1057 = vadd.f32 %v868, %v1056
    %v1058 = vpop.f32.mrb[0].mxu0
    %v1059 = vpop.f32.mrb[0].mxu0
    %v1060 = vadd.f32 %v868, %v1059
    %v1061 = vpop.f32.mrb[0].mxu0
    %1062 = vmatprep.mubr.bf16.mxu0 %v816
    %1063 = vmatmul.mubr.bf16.gmra.mrb[0].mxu0 %v815
    %v1064 = vpop.f32.mrb[0].mxu0
    %v1065 = vadd.f32 %v868, %v1064
    %v1066 = vpop.f32.mrb[0].mxu0
    %v1067 = vpop.f32.mrb[0].mxu0
    %v1068 = vadd.f32 %v868, %v1067
    %v1069 = vpop.f32.mrb[0].mxu0
    %1070 = vmatprep.mubr.bf16.mxu0 %v818
    %1071 = vmatmul.mubr.bf16.gmra.mrb[0].mxu0 %v817
    %v1072 = vpop.f32.mrb[0].mxu0
    %v1073 = vadd.f32 %v868, %v1072
    %v1074 = vpop.f32.mrb[0].mxu0
    %v1075 = vpop.f32.mrb[0].mxu0
    %v1076 = vadd.f32 %v868, %v1075
    %v1077 = vpop.f32.mrb[0].mxu0
    %1078 = vmatprep.mubr.bf16.mxu0 %v820
    %1079 = vmatmul.mubr.bf16.gmra.mrb[0].mxu0 %v819
    %v1080 = vpop.f32.mrb[0].mxu0
    %v1081 = vadd.f32 %v868, %v1080
    %v1082 = vpop.f32.mrb[0].mxu0
    %v1083 = vpop.f32.mrb[0].mxu0
    %v1084 = vadd.f32 %v868, %v1083
    %v1085 = vpop.f32.mrb[0].mxu0
    %1086 = vmatprep.mubr.bf16.mxu0 %v822
    %1087 = vmatmul.mubr.bf16.gmra.mrb[0].mxu0 %v821
    %v1088 = vpop.f32.mrb[0].mxu0
    %v1089 = vadd.f32 %v868, %v1088
    %v1090 = vpop.f32.mrb[0].mxu0
    %v1091 = vpop.f32.mrb[0].mxu0
    %v1092 = vadd.f32 %v868, %v1091
    %v1093 = vpop.f32.mrb[0].mxu0
    %1094 = vmatprep.mubr.bf16.mxu0 %v824
    %1095 = vmatmul.mubr.bf16.gmra.mrb[0].mxu0 %v823
    %v1096 = vpop.f32.mrb[0].mxu0
    %v1097 = vadd.f32 %v868, %v1096
    %v1098 = vpop.f32.mrb[0].mxu0
    %v1099 = vpop.f32.mrb[0].mxu0
    %v1100 = vadd.f32 %v868, %v1099
    %v1101 = vpop.f32.mrb[0].mxu0
    %1102 = vmatprep.mubr.bf16.mxu0 %v826
    %1103 = vmatmul.mubr.bf16.gmra.mrb[0].mxu0 %v825
    %v1104 = vpop.f32.mrb[0].mxu0
    %v1105 = vadd.f32 %v868, %v1104
    %v1106 = vpop.f32.mrb[0].mxu0
    %v1107 = vpop.f32.mrb[0].mxu0
    %v1108 = vadd.f32 %v868, %v1107
    %v1109 = vpop.f32.mrb[0].mxu0
    %1110 = vmatprep.mubr.bf16.mxu0 %v828
    %1111 = vmatmul.mubr.bf16.gmra.mrb[0].mxu0 %v827
    %v1112 = vpop.f32.mrb[0].mxu0
    %v1113 = vadd.f32 %v868, %v1112
    %v1114 = vpop.f32.mrb[0].mxu0
    %v1115 = vpop.f32.mrb[0].mxu0
    %v1116 = vadd.f32 %v868, %v1115
    %v1117 = vpop.f32.mrb[0].mxu0
    %1118 = vmatprep.mubr.bf16.mxu0 %v830
    %1119 = vmatmul.mubr.bf16.gmra.mrb[0].mxu0 %v829
    %v1120 = vpop.f32.mrb[0].mxu0
    %v1121 = vadd.f32 %v868, %v1120
    %v1122 = vpop.f32.mrb[0].mxu0
    %v1123 = vpop.f32.mrb[0].mxu0
    %v1124 = vadd.f32 %v868, %v1123
    %v1125 = vpop.f32.mrb[0].mxu0
    %1126 = vdwg.mxu0
    %v1127 = vmax.f32 %v1001, 0.0
    %v1128 = vmax.f32 %v1004, 0.0
    %v1129 = vmax.f32 %v1009, 0.0
    %v1130 = vmax.f32 %v1012, 0.0
    %v1131 = vmax.f32 %v1017, 0.0
    %v1132 = vmax.f32 %v1020, 0.0
    %v1133 = vmax.f32 %v1025, 0.0
    %v1134 = vmax.f32 %v1028, 0.0
    %v1135 = vmax.f32 %v1033, 0.0
    %v1136 = vmax.f32 %v1036, 0.0
    %v1137 = vmax.f32 %v1041, 0.0
    %v1138 = vmax.f32 %v1044, 0.0
    %v1139 = vmax.f32 %v1049, 0.0
    %v1140 = vmax.f32 %v1052, 0.0
    %v1141 = vmax.f32 %v1057, 0.0
    %v1142 = vmax.f32 %v1060, 0.0
    %v1143 = vmax.f32 %v1065, 0.0
    %v1144 = vmax.f32 %v1068, 0.0
    %v1145 = vmax.f32 %v1073, 0.0
    %v1146 = vmax.f32 %v1076, 0.0
    %v1147 = vmax.f32 %v1081, 0.0
    %v1148 = vmax.f32 %v1084, 0.0
    %v1149 = vmax.f32 %v1089, 0.0
    %v1150 = vmax.f32 %v1092, 0.0
    %v1151 = vmax.f32 %v1097, 0.0
    %v1152 = vmax.f32 %v1100, 0.0
    %v1153 = vmax.f32 %v1105, 0.0
    %v1154 = vmax.f32 %v1108, 0.0
    %v1155 = vmax.f32 %v1113, 0.0
    %v1156 = vmax.f32 %v1116, 0.0
    %v1157 = vmax.f32 %v1121, 0.0
    %v1158 = vmax.f32 %v1124, 0.0
    %v1159 = vpack.c.bf16 %v1128, %v1127
    %v1160 = vpack.c.bf16 %v1130, %v1129
    %v1161 = vpack.c.bf16 %v1132, %v1131
    %v1162 = vpack.c.bf16 %v1134, %v1133
    %v1163 = vpack.c.bf16 %v1136, %v1135
    %v1164 = vpack.c.bf16 %v1138, %v1137
    %v1165 = vpack.c.bf16 %v1140, %v1139
    %v1166 = vpack.c.bf16 %v1142, %v1141
    %v1167 = vpack.c.bf16 %v1144, %v1143
    %v1168 = vpack.c.bf16 %v1146, %v1145
    %v1169 = vpack.c.bf16 %v1148, %v1147
    %v1170 = vpack.c.bf16 %v1150, %v1149
    %v1171 = vpack.c.bf16 %v1152, %v1151
    %v1172 = vpack.c.bf16 %v1154, %v1153
    %v1173 = vpack.c.bf16 %v1156, %v1155
    %v1174 = vpack.c.bf16 %v1158, %v1157
    %v1175 = vld [vmem:[#allocation7] sm:$0xf]
    %v1176 = vld [vmem:[#allocation7 + $0x4] sm:$0xf]
    %v1177 = vld [vmem:[#allocation7 + $0x8] sm:$0xf]
    %v1178 = vld [vmem:[#allocation7 + $0xc] sm:$0xf]
    %v1179 = vld [vmem:[#allocation7 + $0x10] sm:$0xf]
    %v1180 = vld [vmem:[#allocation7 + $0x14] sm:$0xf]
    %v1181 = vld [vmem:[#allocation7 + $0x18] sm:$0xf]
    %v1182 = vld [vmem:[#allocation7 + $0x1c] sm:$0xf]
    %v1183 = vld [vmem:[#allocation7 + $0x20] sm:$0xf]
    %v1184 = vld [vmem:[#allocation7 + $0x24] sm:$0xf]
    %v1185 = vld [vmem:[#allocation7 + $0x28] sm:$0xf]
    %v1186 = vld [vmem:[#allocation7 + $0x2c] sm:$0xf]
    %v1187 = vld [vmem:[#allocation7 + $0x30] sm:$0xf]
    %v1188 = vld [vmem:[#allocation7 + $0x34] sm:$0xf]
    %v1189 = vld [vmem:[#allocation7 + $0x38] sm:$0xf]
    %v1190 = vld [vmem:[#allocation7 + $0x3c] sm:$0xf]
    %v1191 = vld [vmem:[%s4] sm:$0x1]
    %v1193 = vlaneseq
    %v1194 = vshrl.u32 %v1193, 7
    %v1195 = vsub.s32 0, %v1194
    %v1196 = vrot.slane %v1191, %v1195
    %v1214 = vunpack.c.l.b16 %v1175
    %v1215 = vunpack.c.l.b16 %v1176
    %v1216 = vunpack.c.l.b16 %v1177
    %v1217 = vunpack.c.l.b16 %v1178
    %v1218 = vunpack.c.l.b16 %v1179
    %v1219 = vunpack.c.l.b16 %v1180
    %v1220 = vunpack.c.l.b16 %v1181
    %v1221 = vunpack.c.l.b16 %v1182
    %v1222 = vunpack.c.l.b16 %v1183
    %v1223 = vunpack.c.l.b16 %v1184
    %v1224 = vunpack.c.l.b16 %v1185
    %v1225 = vunpack.c.l.b16 %v1186
    %v1226 = vunpack.c.l.b16 %v1187
    %v1227 = vunpack.c.l.b16 %v1188
    %v1228 = vunpack.c.l.b16 %v1189
    %v1229 = vunpack.c.l.b16 %v1190
    %v1230 = vpack.c.b16 %v1215, %v1214
    %v1231 = vpack.c.b16 %v1217, %v1216
    %v1232 = vpack.c.b16 %v1219, %v1218
    %v1233 = vpack.c.b16 %v1221, %v1220
    %v1234 = vpack.c.b16 %v1223, %v1222
    %v1235 = vpack.c.b16 %v1225, %v1224
    %v1236 = vpack.c.b16 %v1227, %v1226
    %v1237 = vpack.c.b16 %v1229, %v1228
    %1246 = vmatprep.subr.bf16.mxu0 0
    %1247 = vmatpush1.bf16.msra.mxu0 %v1230
    %1248 = vmatprep.subr.bf16.mxu0 0
    %1249 = vmatpush1.bf16.msra.mxu0 %v1231
    %1250 = vmatprep.subr.bf16.mxu0 0
    %1251 = vmatpush1.bf16.msra.mxu0 %v1232
    %1252 = vmatprep.subr.bf16.mxu0 0
    %1253 = vmatpush1.bf16.msra.mxu0 %v1233
    %1254 = vmatprep.subr.bf16.mxu0 0
    %1255 = vmatpush1.bf16.msra.mxu0 %v1234
    %1256 = vmatprep.subr.bf16.mxu0 0
    %1257 = vmatpush1.bf16.msra.mxu0 %v1235
    %1258 = vmatprep.subr.bf16.mxu0 0
    %1259 = vmatpush1.bf16.msra.mxu0 %v1236
    %1260 = vmatprep.subr.bf16.mxu0 0
    %1261 = vmatpush1.bf16.msra.mxu0 %v1237
    %1262 = vmatprep.subr.bf16.mxu0 0
    %1263 = vmatpush1.bf16.msra.mxu0 0
    %1264 = vmatprep.subr.bf16.mxu0 0
    %1265 = vmatpush1.bf16.msra.mxu0 0
    %1266 = vmatprep.subr.bf16.mxu0 0
    %1267 = vmatpush1.bf16.msra.mxu0 0
    %1268 = vmatprep.subr.bf16.mxu0 0
    %1269 = vmatpush1.bf16.msra.mxu0 0
    %1270 = vmatprep.subr.bf16.mxu0 0
    %1271 = vmatpush1.bf16.msra.mxu0 0
    %1272 = vmatprep.subr.bf16.mxu0 0
    %1273 = vmatpush1.bf16.msra.mxu0 0
    %1274 = vmatprep.subr.bf16.mxu0 0
    %1275 = vmatpush1.bf16.msra.mxu0 0
    %1276 = vmatprep.subr.bf16.mxu0 0
    %1277 = vmatpush1.bf16.msra.mxu0 0
    %1278 = vmatprep.mubr.bf16.mxu0 0
    %1279 = vmatmul.mubr.bf16.gmra.mrb[0].mxu0 %v1159
    %v1280 = vpop.f32.mrb[0].mxu0
    %v1281 = vadd.f32 %v1196, %v1280
    %v1282 = vpop.f32.mrb[0].mxu0
    %v1283 = vpop.f32.mrb[0].mxu0
    %v1284 = vadd.f32 %v1196, %v1283
    %v1285 = vpop.f32.mrb[0].mxu0
    %1286 = vmatprep.mubr.bf16.mxu0 0
    %1287 = vmatmul.mubr.bf16.gmra.mrb[0].mxu0 %v1160
    %v1288 = vpop.f32.mrb[0].mxu0
    %v1289 = vadd.f32 %v1196, %v1288
    %v1290 = vpop.f32.mrb[0].mxu0
    %v1291 = vpop.f32.mrb[0].mxu0
    %v1292 = vadd.f32 %v1196, %v1291
    %v1293 = vpop.f32.mrb[0].mxu0
    %1294 = vmatprep.mubr.bf16.mxu0 0
    %1295 = vmatmul.mubr.bf16.gmra.mrb[0].mxu0 %v1161
    %v1296 = vpop.f32.mrb[0].mxu0
    %v1297 = vadd.f32 %v1196, %v1296
    %v1298 = vpop.f32.mrb[0].mxu0
    %v1299 = vpop.f32.mrb[0].mxu0
    %v1300 = vadd.f32 %v1196, %v1299
    %v1301 = vpop.f32.mrb[0].mxu0
    %1302 = vmatprep.mubr.bf16.mxu0 0
    %1303 = vmatmul.mubr.bf16.gmra.mrb[0].mxu0 %v1162
    %v1304 = vpop.f32.mrb[0].mxu0
    %v1305 = vadd.f32 %v1196, %v1304
    %v1306 = vpop.f32.mrb[0].mxu0
    %v1307 = vpop.f32.mrb[0].mxu0
    %v1308 = vadd.f32 %v1196, %v1307
    %v1309 = vpop.f32.mrb[0].mxu0
    %1310 = vmatprep.mubr.bf16.mxu0 0
    %1311 = vmatmul.mubr.bf16.gmra.mrb[0].mxu0 %v1163
    %v1312 = vpop.f32.mrb[0].mxu0
    %v1313 = vadd.f32 %v1196, %v1312
    %v1314 = vpop.f32.mrb[0].mxu0
    %v1315 = vpop.f32.mrb[0].mxu0
    %v1316 = vadd.f32 %v1196, %v1315
    %v1317 = vpop.f32.mrb[0].mxu0
    %1318 = vmatprep.mubr.bf16.mxu0 0
    %1319 = vmatmul.mubr.bf16.gmra.mrb[0].mxu0 %v1164
    %v1320 = vpop.f32.mrb[0].mxu0
    %v1321 = vadd.f32 %v1196, %v1320
    %v1322 = vpop.f32.mrb[0].mxu0
    %v1323 = vpop.f32.mrb[0].mxu0
    %v1324 = vadd.f32 %v1196, %v1323
    %v1325 = vpop.f32.mrb[0].mxu0
    %1326 = vmatprep.mubr.bf16.mxu0 0
    %1327 = vmatmul.mubr.bf16.gmra.mrb[0].mxu0 %v1165
    %v1328 = vpop.f32.mrb[0].mxu0
    %v1329 = vadd.f32 %v1196, %v1328
    %v1330 = vpop.f32.mrb[0].mxu0
    %v1331 = vpop.f32.mrb[0].mxu0
    %v1332 = vadd.f32 %v1196, %v1331
    %v1333 = vpop.f32.mrb[0].mxu0
    %1334 = vmatprep.mubr.bf16.mxu0 0
    %1335 = vmatmul.mubr.bf16.gmra.mrb[0].mxu0 %v1166
    %v1336 = vpop.f32.mrb[0].mxu0
    %v1337 = vadd.f32 %v1196, %v1336
    %v1338 = vpop.f32.mrb[0].mxu0
    %v1339 = vpop.f32.mrb[0].mxu0
    %v1340 = vadd.f32 %v1196, %v1339
    %v1341 = vpop.f32.mrb[0].mxu0
    %1342 = vmatprep.mubr.bf16.mxu0 0
    %1343 = vmatmul.mubr.bf16.gmra.mrb[0].mxu0 %v1167
    %v1344 = vpop.f32.mrb[0].mxu0
    %v1345 = vadd.f32 %v1196, %v1344
    %v1346 = vpop.f32.mrb[0].mxu0
    %v1347 = vpop.f32.mrb[0].mxu0
    %v1348 = vadd.f32 %v1196, %v1347
    %v1349 = vpop.f32.mrb[0].mxu0
    %1350 = vmatprep.mubr.bf16.mxu0 0
    %1351 = vmatmul.mubr.bf16.gmra.mrb[0].mxu0 %v1168
    %v1352 = vpop.f32.mrb[0].mxu0
    %v1353 = vadd.f32 %v1196, %v1352
    %v1354 = vpop.f32.mrb[0].mxu0
    %v1355 = vpop.f32.mrb[0].mxu0
    %v1356 = vadd.f32 %v1196, %v1355
    %v1357 = vpop.f32.mrb[0].mxu0
    %1358 = vmatprep.mubr.bf16.mxu0 0
    %1359 = vmatmul.mubr.bf16.gmra.mrb[0].mxu0 %v1169
    %v1360 = vpop.f32.mrb[0].mxu0
    %v1361 = vadd.f32 %v1196, %v1360
    %v1362 = vpop.f32.mrb[0].mxu0
    %v1363 = vpop.f32.mrb[0].mxu0
    %v1364 = vadd.f32 %v1196, %v1363
    %v1365 = vpop.f32.mrb[0].mxu0
    %1366 = vmatprep.mubr.bf16.mxu0 0
    %1367 = vmatmul.mubr.bf16.gmra.mrb[0].mxu0 %v1170
    %v1368 = vpop.f32.mrb[0].mxu0
    %v1369 = vadd.f32 %v1196, %v1368
    %v1370 = vpop.f32.mrb[0].mxu0
    %v1371 = vpop.f32.mrb[0].mxu0
    %v1372 = vadd.f32 %v1196, %v1371
    %v1373 = vpop.f32.mrb[0].mxu0
    %1374 = vmatprep.mubr.bf16.mxu0 0
    %1375 = vmatmul.mubr.bf16.gmra.mrb[0].mxu0 %v1171
    %v1376 = vpop.f32.mrb[0].mxu0
    %v1377 = vadd.f32 %v1196, %v1376
    %v1378 = vpop.f32.mrb[0].mxu0
    %v1379 = vpop.f32.mrb[0].mxu0
    %v1380 = vadd.f32 %v1196, %v1379
    %v1381 = vpop.f32.mrb[0].mxu0
    %1382 = vmatprep.mubr.bf16.mxu0 0
    %1383 = vmatmul.mubr.bf16.gmra.mrb[0].mxu0 %v1172
    %v1384 = vpop.f32.mrb[0].mxu0
    %v1385 = vadd.f32 %v1196, %v1384
    %v1386 = vpop.f32.mrb[0].mxu0
    %v1387 = vpop.f32.mrb[0].mxu0
    %v1388 = vadd.f32 %v1196, %v1387
    %v1389 = vpop.f32.mrb[0].mxu0
    %1390 = vmatprep.mubr.bf16.mxu0 0
    %1391 = vmatmul.mubr.bf16.gmra.mrb[0].mxu0 %v1173
    %v1392 = vpop.f32.mrb[0].mxu0
    %v1393 = vadd.f32 %v1196, %v1392
    %v1394 = vpop.f32.mrb[0].mxu0
    %v1395 = vpop.f32.mrb[0].mxu0
    %v1396 = vadd.f32 %v1196, %v1395
    %v1397 = vpop.f32.mrb[0].mxu0
    %1398 = vmatprep.mubr.bf16.mxu0 0
    %1399 = vmatmul.mubr.bf16.gmra.mrb[0].mxu0 %v1174
    %v1400 = vpop.f32.mrb[0].mxu0
    %v1401 = vadd.f32 %v1196, %v1400
    %v1402 = vpop.f32.mrb[0].mxu0
    %v1403 = vpop.f32.mrb[0].mxu0
    %v1404 = vadd.f32 %v1196, %v1403
    %v1405 = vpop.f32.mrb[0].mxu0
    %1406 = vdwg.mxu0
    %v1407 = vlaneseq
    %v1408 = vand.u32 %v1407, 127
    %vm1409 = vcmp.ge.s32.totalorder %v1408, 64
    %v1410 = vmul.f32 %v1281, 1.442695
    %v1411 = vpow.pop %v1410
    %v1412 = vmul.f32 %v1284, 1.442695
    %v1413 = vpow.pop %v1412
    %v1414 = vmul.f32 %v1289, 1.442695
    %v1415 = vpow.pop %v1414
    %v1416 = vmul.f32 %v1292, 1.442695
    %v1417 = vpow.pop %v1416
    %v1418 = vmul.f32 %v1297, 1.442695
    %v1419 = vpow.pop %v1418
    %v1420 = vmul.f32 %v1300, 1.442695
    %v1421 = vpow.pop %v1420
    %v1422 = vmul.f32 %v1305, 1.442695
    %v1423 = vpow.pop %v1422
    %v1424 = vmul.f32 %v1308, 1.442695
    %v1425 = vpow.pop %v1424
    %v1426 = vmul.f32 %v1313, 1.442695
    %v1427 = vpow.pop %v1426
    %v1428 = vmul.f32 %v1316, 1.442695
    %v1429 = vpow.pop %v1428
    %v1430 = vmul.f32 %v1321, 1.442695
    %v1431 = vpow.pop %v1430
    %v1432 = vmul.f32 %v1324, 1.442695
    %v1433 = vpow.pop %v1432
    %v1434 = vmul.f32 %v1329, 1.442695
    %v1435 = vpow.pop %v1434
    %v1436 = vmul.f32 %v1332, 1.442695
    %v1437 = vpow.pop %v1436
    %v1438 = vmul.f32 %v1337, 1.442695
    %v1439 = vpow.pop %v1438
    %v1440 = vmul.f32 %v1340, 1.442695
    %v1441 = vpow.pop %v1440
    %v1442 = vmul.f32 %v1345, 1.442695
    %v1443 = vpow.pop %v1442
    %v1444 = vmul.f32 %v1348, 1.442695
    %v1445 = vpow.pop %v1444
    %v1446 = vmul.f32 %v1353, 1.442695
    %v1447 = vpow.pop %v1446
    %v1448 = vmul.f32 %v1356, 1.442695
    %v1449 = vpow.pop %v1448
    %v1450 = vmul.f32 %v1361, 1.442695
    %v1451 = vpow.pop %v1450
    %v1452 = vmul.f32 %v1364, 1.442695
    %v1453 = vpow.pop %v1452
    %v1454 = vmul.f32 %v1369, 1.442695
    %v1455 = vpow.pop %v1454
    %v1456 = vmul.f32 %v1372, 1.442695
    %v1457 = vpow.pop %v1456
    %v1458 = vmul.f32 %v1377, 1.442695
    %v1459 = vpow.pop %v1458
    %v1460 = vmul.f32 %v1380, 1.442695
    %v1461 = vpow.pop %v1460
    %v1462 = vmul.f32 %v1385, 1.442695
    %v1463 = vpow.pop %v1462
    %v1464 = vmul.f32 %v1388, 1.442695
    %v1465 = vpow.pop %v1464
    %v1466 = vmul.f32 %v1393, 1.442695
    %v1467 = vpow.pop %v1466
    %v1468 = vmul.f32 %v1396, 1.442695
    %v1469 = vpow.pop %v1468
    %v1470 = vmul.f32 %v1401, 1.442695
    %v1471 = vpow.pop %v1470
    %v1472 = vmul.f32 %v1404, 1.442695
    %v1473 = vpow.pop %v1472
    %v1474 = vsel %vm1409, %v1411, %v1281
    %v1475 = vsel %vm1409, %v1413, %v1284
    %v1476 = vsel %vm1409, %v1415, %v1289
    %v1477 = vsel %vm1409, %v1417, %v1292
    %v1478 = vsel %vm1409, %v1419, %v1297
    %v1479 = vsel %vm1409, %v1421, %v1300
    %v1480 = vsel %vm1409, %v1423, %v1305
    %v1481 = vsel %vm1409, %v1425, %v1308
    %v1482 = vsel %vm1409, %v1427, %v1313
    %v1483 = vsel %vm1409, %v1429, %v1316
    %v1484 = vsel %vm1409, %v1431, %v1321
    %v1485 = vsel %vm1409, %v1433, %v1324
    %v1486 = vsel %vm1409, %v1435, %v1329
    %v1487 = vsel %vm1409, %v1437, %v1332
    %v1488 = vsel %vm1409, %v1439, %v1337
    %v1489 = vsel %vm1409, %v1441, %v1340
    %v1490 = vsel %vm1409, %v1443, %v1345
    %v1491 = vsel %vm1409, %v1445, %v1348
    %v1492 = vsel %vm1409, %v1447, %v1353
    %v1493 = vsel %vm1409, %v1449, %v1356
    %v1494 = vsel %vm1409, %v1451, %v1361
    %v1495 = vsel %vm1409, %v1453, %v1364
    %v1496 = vsel %vm1409, %v1455, %v1369
    %v1497 = vsel %vm1409, %v1457, %v1372
    %v1498 = vsel %vm1409, %v1459, %v1377
    %v1499 = vsel %vm1409, %v1461, %v1380
    %v1500 = vsel %vm1409, %v1463, %v1385
    %v1501 = vsel %vm1409, %v1465, %v1388
    %v1502 = vsel %vm1409, %v1467, %v1393
    %v1503 = vsel %vm1409, %v1469, %v1396
    %v1504 = vsel %vm1409, %v1471, %v1401
    %v1505 = vsel %vm1409, %v1473, %v1404
    %1506 = vst [vmem:[#allocation8] sm:$0xff] %v1474
    %1507 = vst [vmem:[#allocation8 + $0x10] sm:$0xff] %v1475
    %1508 = vst [vmem:[#allocation8 + $0x20] sm:$0xff] %v1476
    %1509 = vst [vmem:[#allocation8 + $0x30] sm:$0xff] %v1477
    %1510 = vst [vmem:[#allocation8 + $0x40] sm:$0xff] %v1478
    %1511 = vst [vmem:[#allocation8 + $0x50] sm:$0xff] %v1479
    %1512 = vst [vmem:[#allocation8 + $0x60] sm:$0xff] %v1480
    %1513 = vst [vmem:[#allocation8 + $0x70] sm:$0xff] %v1481
    %1514 = vst [vmem:[#allocation8 + $0x80] sm:$0xff] %v1482
    %1515 = vst [vmem:[#allocation8 + $0x90] sm:$0xff] %v1483
    %1516 = vst [vmem:[#allocation8 + $0xa0] sm:$0xff] %v1484
    %1517 = vst [vmem:[#allocation8 + $0xb0] sm:$0xff] %v1485
    %1518 = vst [vmem:[#allocation8 + $0xc0] sm:$0xff] %v1486
    %1519 = vst [vmem:[#allocation8 + $0xd0] sm:$0xff] %v1487
    %1520 = vst [vmem:[#allocation8 + $0xe0] sm:$0xff] %v1488
    %1521 = vst [vmem:[#allocation8 + $0xf0] sm:$0xff] %v1489
    %1522 = vst [vmem:[#allocation8 + $0x100] sm:$0xff] %v1490
    %1523 = vst [vmem:[#allocation8 + $0x110] sm:$0xff] %v1491
    %1524 = vst [vmem:[#allocation8 + $0x120] sm:$0xff] %v1492
    %1525 = vst [vmem:[#allocation8 + $0x130] sm:$0xff] %v1493
    %1526 = vst [vmem:[#allocation8 + $0x140] sm:$0xff] %v1494
    %1527 = vst [vmem:[#allocation8 + $0x150] sm:$0xff] %v1495
    %1528 = vst [vmem:[#allocation8 + $0x160] sm:$0xff] %v1496
    %1529 = vst [vmem:[#allocation8 + $0x170] sm:$0xff] %v1497
    %1530 = vst [vmem:[#allocation8 + $0x180] sm:$0xff] %v1498
    %1531 = vst [vmem:[#allocation8 + $0x190] sm:$0xff] %v1499
    %1532 = vst [vmem:[#allocation8 + $0x1a0] sm:$0xff] %v1500
    %1533 = vst [vmem:[#allocation8 + $0x1b0] sm:$0xff] %v1501
    %1534 = vst [vmem:[#allocation8 + $0x1c0] sm:$0xff] %v1502
    %1535 = vst [vmem:[#allocation8 + $0x1d0] sm:$0xff] %v1503
    %1536 = vst [vmem:[#allocation8 + $0x1e0] sm:$0xff] %v1504
    %1537 = vst [vmem:[#allocation8 + $0x1f0] sm:$0xff] %v1505
    %1538 = vst [vmem:[#allocation8 + $0x8] sm:$0xff] %v129
    %1539 = vst [vmem:[#allocation8 + $0x18] sm:$0xff] %v132
    %1540 = vst [vmem:[#allocation8 + $0x28] sm:$0xff] %v135
    %1541 = vst [vmem:[#allocation8 + $0x38] sm:$0xff] %v138
    %1542 = vst [vmem:[#allocation8 + $0x48] sm:$0xff] %v141
    %1543 = vst [vmem:[#allocation8 + $0x58] sm:$0xff] %v144
    %1544 = vst [vmem:[#allocation8 + $0x68] sm:$0xff] %v147
    %1545 = vst [vmem:[#allocation8 + $0x78] sm:$0xff] %v150
    %1546 = vst [vmem:[#allocation8 + $0x88] sm:$0xff] %v153
    %1547 = vst [vmem:[#allocation8 + $0x98] sm:$0xff] %v156
    %1548 = vst [vmem:[#allocation8 + $0xa8] sm:$0xff] %v159
    %1549 = vst [vmem:[#allocation8 + $0xb8] sm:$0xff] %v162
    %1550 = vst [vmem:[#allocation8 + $0xc8] sm:$0xff] %v165
    %1551 = vst [vmem:[#allocation8 + $0xd8] sm:$0xff] %v168
    %1552 = vst [vmem:[#allocation8 + $0xe8] sm:$0xff] %v171
    %1553 = vst [vmem:[#allocation8 + $0xf8] sm:$0xff] %v174
    %1554 = vst [vmem:[#allocation8 + $0x108] sm:$0xff] %v177
    %1555 = vst [vmem:[#allocation8 + $0x118] sm:$0xff] %v180
    %1556 = vst [vmem:[#allocation8 + $0x128] sm:$0xff] %v183
    %1557 = vst [vmem:[#allocation8 + $0x138] sm:$0xff] %v186
    %1558 = vst [vmem:[#allocation8 + $0x148] sm:$0xff] %v189
    %1559 = vst [vmem:[#allocation8 + $0x158] sm:$0xff] %v192
    %1560 = vst [vmem:[#allocation8 + $0x168] sm:$0xff] %v195
    %1561 = vst [vmem:[#allocation8 + $0x178] sm:$0xff] %v198
    %1562 = vst [vmem:[#allocation8 + $0x188] sm:$0xff] %v201
    %1563 = vst [vmem:[#allocation8 + $0x198] sm:$0xff] %v204
    %1564 = vst [vmem:[#allocation8 + $0x1a8] sm:$0xff] %v207
    %1565 = vst [vmem:[#allocation8 + $0x1b8] sm:$0xff] %v210
    %1566 = vst [vmem:[#allocation8 + $0x1c8] sm:$0xff] %v213
    %1567 = vst [vmem:[#allocation8 + $0x1d8] sm:$0xff] %v216
    %1568 = vst [vmem:[#allocation8 + $0x1e8] sm:$0xff] %v219
    %1569 = vst [vmem:[#allocation8 + $0x1f8] sm:$0xff] %v222
    // Predicated region
    $region34: #{tpu_custom_call.1} parent=1 // pred_check
      _
    $region35: #{tpu_custom_call.1} parent=1 // pred_check_branch
      %1571 = sbr.rel (0) target = $region37
    $region36: #{tpu_custom_call.1} parent=1 // pred_region
      %s1573 = ssub.s32 8192, 8192
      %1574 = vsyncadd [#allocation4], %s1573
      %s1575 = sshll.u32 [#allocation8], 4
      %s1576 = int_to_ptr.vmem [resolvable:$true] %s1575
      %1581 = dma.vmem_to_hbm [thread:$0]  %s1576, 8192, %s5, [#allocation4], 256, 256, 16
    $region37: #{tpu_custom_call.1} parent=1 // pred_fallthru
      _
    // Predicated region
    $region38: #{tpu_custom_call.1} parent=1 // pred_check
      _
    $region39: #{tpu_custom_call.1} parent=1 // pred_check_branch
      %1583 = sbr.rel (0) target = $region41
    $region40: #{tpu_custom_call.1} parent=1 // pred_region
      %1584 = dma.done [#allocation4], 8192
    $region41: #{tpu_custom_call.1} parent=1 // pred_fallthru
      _
    %1585 = vsyncpa [#allocation3], 1
    %1586 = vsyncpa [#allocation6], 1
    %1587 = vsyncpa [#allocation4], 1

</llo_original>
